<compile_context>
chip_gen: v7x
topology: tpu7x:2x2x1
jax: 0.10.0
libtpu: 0.0.40
codegen_flags: <defaults>
</compile_context>

<pallas_src>
import functools

import jax
import jax.numpy as jnp
from jax.experimental import pallas as pl
from jax.experimental.pallas import tpu as pltpu


def _generator_kernel(points_ref, plane_ref, wbin_ref, *out_refs, c_real, with_h2):
    # points_ref: (B, TN, D)      f32
    # plane_ref : (B, D, P)       f32
    # wbin_ref  : (P, C_pad)      bf16, entries exactly {0, 1}; pad cols = edge copies
    # out refs  : [h2 (B, TN, C)] , h3 (B, TN)   (h2 only when with_h2)
    if with_h2:
        h2_ref, h3_ref = out_refs
    else:
        (h3_ref,) = out_refs

    b_dim, tn, d_dim = points_ref.shape
    c_pad = wbin_ref.shape[1]

    pts = points_ref[...]   # (B, TN, D) f32
    pm = plane_ref[...]     # (B, D, P)  f32

    # h1 = relu(points @ plane_m): K = D = 4 -> keep it off the MXU and do D
    # unrolled broadcast multiply-adds on the VPU over the whole (B, TN, P) block.
    h1 = pts[:, :, 0:1] * pm[:, 0:1, :]
    for d in range(1, d_dim):
        h1 = h1 + pts[:, :, d:d + 1] * pm[:, d:d + 1, :]
    h1 = jnp.maximum(h1, 0.0)                                   # (B, TN, P) f32

    # One stacked MXU matmul for the whole block: single w_bin weight push,
    # bf16 operands with f32 accumulation.
    h1_flat = h1.astype(jnp.bfloat16).reshape(b_dim * tn, -1)   # (B*TN, P) bf16
    h2 = jnp.dot(h1_flat, wbin_ref[...],
                 preferred_element_type=jnp.float32)            # (B*TN, C_pad) f32
    h2 = h2.reshape(b_dim, tn, c_pad)

    # Fused min over the convex dim. Padded convex columns duplicate a real column
    # (edge padding in the wrapper), so they can never change the min.
    h3_ref[...] = jnp.min(h2, axis=-1).astype(h3_ref.dtype)     # (B, TN), lane dense

    if with_h2:
        if c_pad != c_real:
            h2 = h2[:, :, :c_real]
        h2_ref[...] = h2.astype(h2_ref.dtype)


def generator_forward(points, plane_m, convex_layer_weights, convex_mask=None,
                      *, return_h2=True):
    """Pallas TPU equivalent of Generator.forward(points, plane_m, convex_mask=None).

    Returns (h2, h3) like the PyTorch module. If return_h2=False, skips the h2 HBM
    writeback (dominant traffic) and returns (None, h3).
    """
    if convex_mask is not None:
        # TODO(synk): convex_mask != None branch (additive mask before the min) not wired in.
        raise NotImplementedError("convex_mask path not implemented in the Pallas kernel")

    B, N, D = points.shape
    Bp, D2, P = plane_m.shape
    assert (Bp, D2) == (B, D)
    P2, C = convex_layer_weights.shape
    assert P2 == P

    LANE = 128

    # Hoist (W > 0.01) binarization out of the kernel; {0,1} is exact in bf16. Pad
    # the convex dim to a multiple of 128 lanes with EDGE copies of the last real
    # column, so the min over padded columns is unchanged (no in-kernel masking).
    c_pad = ((C + LANE - 1) // LANE) * LANE
    w_bin = (convex_layer_weights > 0.01).astype(jnp.bfloat16)
    if c_pad != C:
        w_bin = jnp.pad(w_bin, ((0, 0), (0, c_pad - C)), mode="edge")

    # ---- tile-size / VMEM budgeting -------------------------------------------
    # Per-N-row working set (bytes): double-buffered input/output blocks plus
    # in-kernel temporaries (h1 f32 + h1 bf16, h2 f32 matmul result).
    bytes_per_row = B * (
        2 * D * 4                              # points block (double buffered)
        + P * (4 + 2)                          # h1 f32 + h1 bf16 temporaries
        + c_pad * 4                            # h2 matmul result (f32)
        + (2 * C * 4 if return_h2 else 0)      # h2 output block (double buffered)
        + 2 * 4                                # h3 output block (double buffered)
    )
    # Constant-index blocks (DMA'd once, 2 buffers allocated by default).
    resident_bytes = 2 * (B * D * P * 4) + 2 * (P * c_pad * 2)

    vmem_cap = 64 * 1024 * 1024                # conservative default: v7x per-TC VMEM
    try:
        vmem_cap = int(pltpu.get_tpu_info().vmem_capacity_bytes)
    except Exception:
        pass
    budget = max((3 * vmem_cap) // 4 - resident_bytes, 4 * 1024 * 1024)

    if N <= LANE:
        tn = N                                  # full-dim block (always legal)
    else:
        tn = min(N, max(LANE, (budget // bytes_per_row) // LANE * LANE))
        # At least two grid steps so v7x's second TensorCore gets work.
        half = ((pl.cdiv(N, 2) + LANE - 1) // LANE) * LANE
        tn = min(tn, half)
    grid = (pl.cdiv(N, tn),)

    vmem_limit = int(max(32 * 1024 * 1024,
                         min(resident_bytes + tn * bytes_per_row + (4 << 20),
                             (7 * vmem_cap) // 8)))

    # ---- outputs ----------------------------------------------------------------
    out_shape = []
    out_specs = []
    if return_h2:
        out_shape.append(jax.ShapeDtypeStruct((B, N, C), jnp.float32))
        out_specs.append(pl.BlockSpec((B, tn, C), lambda n: (0, n, 0)))
    out_shape.append(jax.ShapeDtypeStruct((B, N), jnp.float32))
    out_specs.append(pl.BlockSpec((B, tn), lambda n: (0, n)))

    cost = pl.CostEstimate(
        flops=int(2 * B * N * P * c_pad + 2 * B * N * D * P),
        transcendentals=0,
        bytes_accessed=int(points.size * 4 + plane_m.size * 4 + w_bin.size * 2
                           + (B * N * C * 4 if return_h2 else 0) + B * N * 4),
    )

    outs = pl.pallas_call(
        functools.partial(_generator_kernel, c_real=C, with_h2=return_h2),
        out_shape=tuple(out_shape),
        grid_spec=pltpu.PrefetchScalarGridSpec(
            num_scalar_prefetch=0,
            grid=grid,
            in_specs=[
                pl.BlockSpec((B, tn, D), lambda n: (0, n, 0)),
                pl.BlockSpec((B, D, P), lambda n: (0, 0, 0)),   # constant -> DMA'd once
                pl.BlockSpec((P, c_pad), lambda n: (0, 0)),     # constant -> DMA'd once
            ],
            out_specs=out_specs,
        ),
        compiler_params=pltpu.CompilerParams(
            dimension_semantics=("parallel",),   # N tiles shard across v7x TensorCores
            vmem_limit_bytes=vmem_limit,
        ),
        cost_estimate=cost,
    )(points.astype(jnp.float32), plane_m.astype(jnp.float32), w_bin)

    if return_h2:
        h2, h3_flat = outs
    else:
        h2 = None
        h3_flat = outs[0]

    h3 = h3_flat[:, :, None]   # restore keepdim=True shape (B, N, 1); free metadata reshape
    return h2, h3


def _reference_forward(points, plane_m, w):
    h1 = jnp.maximum(jnp.einsum("bnd,bdp->bnp", points, plane_m), 0.0)
    h2 = jnp.einsum("bnp,pc->bnc", h1, (w > 0.01).astype(jnp.float32))
    h3 = jnp.min(h2, axis=2, keepdims=True)
    return h2, h3


if __name__ == "__main__":
    # Small, TPU-tile-friendly shapes consistent with the module.
    B = 2     # batch
    N = 256   # number of query points (>= 2 grid steps on the N axis)
    D = 4     # homogeneous point coordinate dim
    P = 256   # p_dim (number of planes)
    C = 64    # c_dim (number of convexes)

    key = jax.random.PRNGKey(0)
    k_pts, k_plane, k_w = jax.random.split(key, 3)

    points = jax.random.normal(k_pts, (B, N, D), dtype=jnp.float32)
    plane_m = jax.random.normal(k_plane, (B, D, P), dtype=jnp.float32)
    # nn.init.normal_(convex_layer_weights, mean=0.0, std=0.02)
    convex_layer_weights = 0.02 * jax.random.normal(k_w, (P, C), dtype=jnp.float32)

    h2, h3 = generator_forward(points, plane_m, convex_layer_weights)
    h2 = jax.block_until_ready(h2)
    h3 = jax.block_until_ready(h3)

    h2_ref, h3_ref = _reference_forward(points, plane_m, convex_layer_weights)
    assert h2.shape == (B, N, C) and h3.shape == (B, N, 1)
    # bf16 MXU path for h1 @ w_bin (f32 accumulation) -> loosen tolerance vs f32 ref.
    assert jnp.allclose(h2, h2_ref, rtol=2e-2, atol=2e-2), float(jnp.max(jnp.abs(h2 - h2_ref)))
    assert jnp.allclose(h3, h3_ref, rtol=2e-2, atol=2e-2), float(jnp.max(jnp.abs(h3 - h3_ref)))

    # h3-only mode: skips the dominant h2 HBM writeback entirely.
    _, h3_only = generator_forward(points, plane_m, convex_layer_weights, return_h2=False)
    h3_only = jax.block_until_ready(h3_only)
    assert h3_only.shape == (B, N, 1)
    assert jnp.allclose(h3_only, h3_ref, rtol=2e-2, atol=2e-2), float(
        jnp.max(jnp.abs(h3_only - h3_ref)))

    print("KERNEL_OK")
</pallas_src>

<mosaic_0001>
module attributes {stable_mosaic.version = 11 : i64} {
  func.func @_generator_kernel(%arg0: i32, %arg1: memref<2x128x4xf32, #tpu.memory_space<vmem>>, %arg2: memref<2x4x256xf32, #tpu.memory_space<vmem>>, %arg3: memref<256x128xbf16, #tpu.memory_space<vmem>>, %arg4: memref<2x128x64xf32, #tpu.memory_space<vmem>>, %arg5: memref<2x128xf32, #tpu.memory_space<vmem>>) attributes {dimension_semantics = [#tpu.dimension_semantics<parallel>], iteration_bounds = array<i64: 2>, scalar_prefetch = 0 : i64, scratch_operands = 0 : i64, tpu.core_type = #tpu.core_type<tc>, window_params = [{transform_indices = @transform_0, window_bounds = array<i64: 2, 128, 4>}, {pipeline_mode = #tpu.pipeline_mode<synchronous>, transform_indices = @transform_1, window_bounds = array<i64: 2, 4, 256>}, {pipeline_mode = #tpu.pipeline_mode<synchronous>, transform_indices = @transform_2, window_bounds = array<i64: 256, 128>}, {transform_indices = @transform_3, window_bounds = array<i64: 2, 128, 64>}, {transform_indices = @transform_4, window_bounds = array<i64: 2, 128>}]} {
    %c0 = arith.constant 0 : index
    %c0_0 = arith.constant 0 : index
    %c0_1 = arith.constant 0 : index
    %0 = vector.load %arg1[%c0, %c0_0, %c0_1] : memref<2x128x4xf32, #tpu.memory_space<vmem>>, vector<2x128x4xf32>
    %c0_2 = arith.constant 0 : index
    %c0_3 = arith.constant 0 : index
    %c0_4 = arith.constant 0 : index
    %1 = vector.load %arg2[%c0_2, %c0_3, %c0_4] : memref<2x4x256xf32, #tpu.memory_space<vmem>>, vector<2x4x256xf32>
    %2 = vector.extract_strided_slice %0 {offsets = [0, 0, 0], sizes = [2, 128, 1], strides = [1, 1, 1]} : vector<2x128x4xf32> to vector<2x128x1xf32>
    %3 = vector.extract_strided_slice %1 {offsets = [0, 0, 0], sizes = [2, 1, 256], strides = [1, 1, 1]} : vector<2x4x256xf32> to vector<2x1x256xf32>
    %4 = vector.broadcast %2 : vector<2x128x1xf32> to vector<2x128x256xf32>
    %5 = vector.broadcast %3 : vector<2x1x256xf32> to vector<2x128x256xf32>
    %6 = arith.mulf %4, %5 : vector<2x128x256xf32>
    %7 = vector.extract_strided_slice %0 {offsets = [0, 0, 1], sizes = [2, 128, 1], strides = [1, 1, 1]} : vector<2x128x4xf32> to vector<2x128x1xf32>
    %8 = vector.extract_strided_slice %1 {offsets = [0, 1, 0], sizes = [2, 1, 256], strides = [1, 1, 1]} : vector<2x4x256xf32> to vector<2x1x256xf32>
    %9 = vector.broadcast %7 : vector<2x128x1xf32> to vector<2x128x256xf32>
    %10 = vector.broadcast %8 : vector<2x1x256xf32> to vector<2x128x256xf32>
    %11 = arith.mulf %9, %10 : vector<2x128x256xf32>
    %12 = arith.addf %6, %11 : vector<2x128x256xf32>
    %13 = vector.extract_strided_slice %0 {offsets = [0, 0, 2], sizes = [2, 128, 1], strides = [1, 1, 1]} : vector<2x128x4xf32> to vector<2x128x1xf32>
    %14 = vector.extract_strided_slice %1 {offsets = [0, 2, 0], sizes = [2, 1, 256], strides = [1, 1, 1]} : vector<2x4x256xf32> to vector<2x1x256xf32>
    %15 = vector.broadcast %13 : vector<2x128x1xf32> to vector<2x128x256xf32>
    %16 = vector.broadcast %14 : vector<2x1x256xf32> to vector<2x128x256xf32>
    %17 = arith.mulf %15, %16 : vector<2x128x256xf32>
    %18 = arith.addf %12, %17 : vector<2x128x256xf32>
    %19 = vector.extract_strided_slice %0 {offsets = [0, 0, 3], sizes = [2, 128, 1], strides = [1, 1, 1]} : vector<2x128x4xf32> to vector<2x128x1xf32>
    %20 = vector.extract_strided_slice %1 {offsets = [0, 3, 0], sizes = [2, 1, 256], strides = [1, 1, 1]} : vector<2x4x256xf32> to vector<2x1x256xf32>
    %21 = vector.broadcast %19 : vector<2x128x1xf32> to vector<2x128x256xf32>
    %22 = vector.broadcast %20 : vector<2x1x256xf32> to vector<2x128x256xf32>
    %23 = arith.mulf %21, %22 : vector<2x128x256xf32>
    %24 = arith.addf %18, %23 : vector<2x128x256xf32>
    %cst = arith.constant 0.000000e+00 : f32
    %25 = vector.broadcast %cst : f32 to vector<2x128x256xf32>
    %26 = arith.maximumf %24, %25 : vector<2x128x256xf32>
    %27 = arith.truncf %26 : vector<2x128x256xf32> to vector<2x128x256xbf16>
    %28 = vector.shape_cast %27 : vector<2x128x256xbf16> to vector<256x256xbf16>
    %c0_5 = arith.constant 0 : index
    %c0_6 = arith.constant 0 : index
    %29 = vector.load %arg3[%c0_5, %c0_6] : memref<256x128xbf16, #tpu.memory_space<vmem>>, vector<256x128xbf16>
    %cst_7 = arith.constant dense<0.000000e+00> : vector<256x128xf32>
    %30 = tpu.matmul %28, %29, %cst_7 {dimension_numbers = #tpu.dot_dimension_numbers<[1], [0], [0], [1], [0, 0, 1, 1], [], []>} : vector<256x256xbf16>, vector<256x128xbf16>, vector<256x128xf32> -> vector<256x128xf32>
    %31 = vector.shape_cast %30 : vector<256x128xf32> to vector<2x128x128xf32>
    %cst_8 = arith.constant dense<0x7F800000> : vector<2x128xf32>
    %32 = vector.multi_reduction <minimumf>, %31, %cst_8 [2] : vector<2x128x128xf32> to vector<2x128xf32>
    %c0_9 = arith.constant 0 : index
    %c0_10 = arith.constant 0 : index
    %33 = vector.load %arg5[%c0_9, %c0_10] : memref<2x128xf32, #tpu.memory_space<vmem>>, vector<2x128xf32>
    tpu.vector_store %arg5[%c0_9, %c0_10], %32 {strides = array<i32>} : memref<2x128xf32, #tpu.memory_space<vmem>>, vector<2x128xf32>,
    %34 = vector.extract_strided_slice %31 {offsets = [0, 0, 0], sizes = [2, 128, 64], strides = [1, 1, 1]} : vector<2x128x128xf32> to vector<2x128x64xf32>
    %c0_11 = arith.constant 0 : index
    %c0_12 = arith.constant 0 : index
    %c0_13 = arith.constant 0 : index
    %35 = vector.load %arg4[%c0_11, %c0_12, %c0_13] : memref<2x128x64xf32, #tpu.memory_space<vmem>>, vector<2x128x64xf32>
    tpu.vector_store %arg4[%c0_11, %c0_12, %c0_13], %34 {strides = array<i32>} : memref<2x128x64xf32, #tpu.memory_space<vmem>>, vector<2x128x64xf32>,
    return
  }
  func.func @transform_0(%arg0: i32) -> (i32, i32, i32) {
    %c0_i32 = arith.constant 0 : i32
    %c0_i32_0 = arith.constant 0 : i32
    %c0_i32_1 = arith.constant 0 : i32
    return %c0_i32, %arg0, %c0_i32_0 : i32, i32, i32
  }
  func.func @transform_1(%arg0: i32) -> (i32, i32, i32) {
    %c0_i32 = arith.constant 0 : i32
    %c0_i32_0 = arith.constant 0 : i32
    %c0_i32_1 = arith.constant 0 : i32
    %c0_i32_2 = arith.constant 0 : i32
    return %c0_i32, %c0_i32_0, %c0_i32_1 : i32, i32, i32
  }
  func.func @transform_2(%arg0: i32) -> (i32, i32) {
    %c0_i32 = arith.constant 0 : i32
    %c0_i32_0 = arith.constant 0 : i32
    %c0_i32_1 = arith.constant 0 : i32
    return %c0_i32, %c0_i32_0 : i32, i32
  }
  func.func @transform_3(%arg0: i32) -> (i32, i32, i32) {
    %c0_i32 = arith.constant 0 : i32
    %c0_i32_0 = arith.constant 0 : i32
    %c0_i32_1 = arith.constant 0 : i32
    return %c0_i32, %arg0, %c0_i32_0 : i32, i32, i32
  }
  func.func @transform_4(%arg0: i32) -> (i32, i32) {
    %c0_i32 = arith.constant 0 : i32
    %c0_i32_0 = arith.constant 0 : i32
    return %c0_i32, %arg0 : i32, i32
  }
}

</mosaic_0001>

<llo_original>
// kernel: tpu_custom_call.1
$region0: #{tpu_custom_call.1}
  #allocation0 [shape = 'u32[]', space=smem, size = 0x4, offset = 0x4, fixed_abs, tag = 'smem constant byte address 0x4 - core index']
  #allocation1 [shape = 'u32[144,128]{1,0:T(1,128)}', space=vmem, size = 0x12000, scoped, tag = 'internal scratch']
  %s0 = inlined_call_operand.vmem [shape: f32[2,256,4], index: 0, kind: input, shape index: {}]
  %s1 = inlined_call_operand.vmem [shape: f32[2,4,256], index: 1, kind: input, shape index: {}]
  %s2 = inlined_call_operand.vmem [shape: bf16[256,128], index: 2, kind: input, shape index: {}]
  %s3 = inlined_call_operand.vmem [shape: f32[2,256,64], index: 3, kind: output, shape index: {0}]
  %s4 = inlined_call_operand.hbm [shape: f32[2,256], index: 4, kind: output, shape index: {1}]
  %5 = xla_tuple %s3, %s4
  %s6 = sld [smem:[#allocation0]]
  $region125: #{tpu_custom_call.1} parent=0
    _
  %s8 = ssub.s32 1, %s6
  %s9 = scalar_select 0, %s8, %s6
  $region1: #{tpu_custom_call.1} parent=0
    #allocation2 [shape = 'u8[262144]{0}', space=vmem, size = 0x40000, scoped, tag = 'input window, operand 0']
    #allocation3 [shape = 'u8[262144]{0}', space=vmem, size = 0x40000, scoped, tag = 'output window, operand 0']
    #allocation4 [shape = 'u8[2048]{0}', space=vmem, size = 0x800, scoped, tag = 'output window, operand 1']
    #allocation5 [shape = 's32[2]{0}', space=sflag, size = 0x8, scoped, tag = 'scoped memory for tpu_custom_call.1']
    %10 = vsyncpa [#allocation5], 0
    %s11 = scalar_lea.sflag [#allocation5], 1
    %12 = vsyncpa %s11, 0
    loop: start=0, step=1, limit=4
    $region2: #{tpu_custom_call.1} parent=1 // loop_pre_header
      _
    $region3: #{tpu_custom_call.1} parent=1 // loop_header
      %s14 = sphi 0, %s18
      %p15 = scmp.ge.s32.totalorder %s14, 4
      %s24 = sphi 0, %s26
      %s27 = sphi 0, %s24
      %s28 = sphi 0, %s27
      %s44 = sphi 0, %s28
      %s48 = sphi 0, %s48
      %s50 = sphi 0, %s48
      %s51 = sphi 0, %s50
      %s65 = sphi 0, %s51
      %s69 = sphi 0, %s69
      %s71 = sphi 0, %s69
      %s72 = sphi 0, %s71
      %s86 = sphi 0, %s72
      %s92 = sphi 0, %s94
      %s95 = sphi 0, %s92
      %s96 = sphi 0, %s95
      %s112 = sphi 0, %s96
      %s118 = sphi 0, %s120
      %s121 = sphi 0, %s118
      %s122 = sphi 0, %s121
      %s138 = sphi 0, %s122
    $region4: #{tpu_custom_call.1} parent=1 // loop_header_branch
      %17 = sbr.rel (%p15) target = $region8
    $region5: #{tpu_custom_call.1} parent=1 // loop_body
      %s19 = ssub.s32 %s14, 1
      %s20 = ssub.s32 %s14, 2
      %s21 = sadd.s32 %s14, 1
      %s22 = ssub.s32 %s14, %s21
      %p23 = scmp.eq.s32.totalorder %s22, 0
      %s25 = sadd.s32 %s24, 1
      %s26 = scalar_select %p23, %s24, %s25
      %p29 = pneg %p23
      %p30 = scmp.eq.s32.totalorder %s14, 1
      %p31 = por %p29, %p30
      %p32 = scmp.ne.s32.totalorder %s24, %s27
      %p33 = scmp.eq.s32.totalorder %s14, 0
      %p34 = por %p32, %p33
      %p35 = scmp.ne.s32.totalorder %s24, %s27
      %p36 = scmp.eq.s32.totalorder %s19, 1
      %p37 = por %p35, %p36
      %p38 = scmp.ne.s32.totalorder %s27, %s28
      %p39 = scmp.eq.s32.totalorder %s19, 0
      %p40 = por %p38, %p39
      %p41 = scmp.ne.s32.totalorder %s27, %s28
      %p42 = scmp.eq.s32.totalorder %s20, 1
      %p43 = por %p41, %p42
      %p45 = scmp.ne.s32.totalorder %s28, %s44
      %p46 = scmp.eq.s32.totalorder %s20, 0
      %p47 = por %p45, %p46
      %s49 = sadd.s32 %s48, 1
      %p52 = scmp.eq.s32.totalorder %s14, 1
      %p53 = scmp.ne.s32.totalorder %s48, %s50
      %p54 = scmp.eq.s32.totalorder %s14, 0
      %p55 = por %p53, %p54
      %p56 = scmp.ne.s32.totalorder %s48, %s50
      %p57 = scmp.eq.s32.totalorder %s19, 1
      %p58 = por %p56, %p57
      %p59 = scmp.ne.s32.totalorder %s50, %s51
      %p60 = scmp.eq.s32.totalorder %s19, 0
      %p61 = por %p59, %p60
      %p62 = scmp.ne.s32.totalorder %s50, %s51
      %p63 = scmp.eq.s32.totalorder %s20, 1
      %p64 = por %p62, %p63
      %p66 = scmp.ne.s32.totalorder %s51, %s65
      %p67 = scmp.eq.s32.totalorder %s20, 0
      %p68 = por %p66, %p67
      %s70 = sadd.s32 %s69, 1
      %p73 = scmp.eq.s32.totalorder %s14, 1
      %p74 = scmp.ne.s32.totalorder %s69, %s71
      %p75 = scmp.eq.s32.totalorder %s14, 0
      %p76 = por %p74, %p75
      %p77 = scmp.ne.s32.totalorder %s69, %s71
      %p78 = scmp.eq.s32.totalorder %s19, 1
      %p79 = por %p77, %p78
      %p80 = scmp.ne.s32.totalorder %s71, %s72
      %p81 = scmp.eq.s32.totalorder %s19, 0
      %p82 = por %p80, %p81
      %p83 = scmp.ne.s32.totalorder %s71, %s72
      %p84 = scmp.eq.s32.totalorder %s20, 1
      %p85 = por %p83, %p84
      %p87 = scmp.ne.s32.totalorder %s72, %s86
      %p88 = scmp.eq.s32.totalorder %s20, 0
      %p89 = por %p87, %p88
      %s90 = ssub.s32 %s14, %s21
      %p91 = scmp.eq.s32.totalorder %s90, 0
      %s93 = sadd.s32 %s92, 1
      %s94 = scalar_select %p91, %s92, %s93
      %p97 = pneg %p91
      %p98 = scmp.eq.s32.totalorder %s14, 1
      %p99 = por %p97, %p98
      %p100 = scmp.ne.s32.totalorder %s92, %s95
      %p101 = scmp.eq.s32.totalorder %s14, 0
      %p102 = por %p100, %p101
      %p103 = scmp.ne.s32.totalorder %s92, %s95
      %p104 = scmp.eq.s32.totalorder %s19, 1
      %p105 = por %p103, %p104
      %p106 = scmp.ne.s32.totalorder %s95, %s96
      %p107 = scmp.eq.s32.totalorder %s19, 0
      %p108 = por %p106, %p107
      %p109 = scmp.ne.s32.totalorder %s95, %s96
      %p110 = scmp.eq.s32.totalorder %s20, 1
      %p111 = por %p109, %p110
      %p113 = scmp.ne.s32.totalorder %s96, %s112
      %p114 = scmp.eq.s32.totalorder %s20, 0
      %p115 = por %p113, %p114
      %s116 = ssub.s32 %s14, %s21
      %p117 = scmp.eq.s32.totalorder %s116, 0
      %s119 = sadd.s32 %s118, 1
      %s120 = scalar_select %p117, %s118, %s119
      %p123 = pneg %p117
      %p124 = scmp.eq.s32.totalorder %s14, 1
      %p125 = por %p123, %p124
      %p126 = scmp.ne.s32.totalorder %s118, %s121
      %p127 = scmp.eq.s32.totalorder %s14, 0
      %p128 = por %p126, %p127
      %p129 = scmp.ne.s32.totalorder %s118, %s121
      %p130 = scmp.eq.s32.totalorder %s19, 1
      %p131 = por %p129, %p130
      %p132 = scmp.ne.s32.totalorder %s121, %s122
      %p133 = scmp.eq.s32.totalorder %s19, 0
      %p134 = por %p132, %p133
      %p135 = scmp.ne.s32.totalorder %s121, %s122
      %p136 = scmp.eq.s32.totalorder %s20, 1
      %p137 = por %p135, %p136
      %p139 = scmp.ne.s32.totalorder %s122, %s138
      %p140 = scmp.eq.s32.totalorder %s20, 0
      %p141 = por %p139, %p140
      %p142 = scmp.le.s32.totalorder 1, %s14
      %p143 = scmp.lt.s32.totalorder %s14, 3
      %p144 = pnand %p142, %p143
      %p145 = pneg %p144
      // Predicated region
      $region9: #{tpu_custom_call.1} parent=5 // pred_check
        _
      $region10: #{tpu_custom_call.1} parent=5 // pred_check_branch
        %147 = sbr.rel (%p144) target = $region12
      $region11: #{tpu_custom_call.1} parent=5 // pred_region
        %s148 = ssub.s32 %s14, 1
        // Predicated region
        $region13: #{tpu_custom_call.1} parent=11 // pred_check
          %p149 = pneg %p61
        $region14: #{tpu_custom_call.1} parent=11 // pred_check_branch
          %151 = sbr.rel (%p149) target = $region16
        $region15: #{tpu_custom_call.1} parent=11 // pred_region
          _
        $region16: #{tpu_custom_call.1} parent=11 // pred_fallthru
          _
        // Predicated region
        $region17: #{tpu_custom_call.1} parent=11 // pred_check
          %p152 = pneg %p82
        $region18: #{tpu_custom_call.1} parent=11 // pred_check_branch
          %154 = sbr.rel (%p152) target = $region20
        $region19: #{tpu_custom_call.1} parent=11 // pred_region
          _
        $region20: #{tpu_custom_call.1} parent=11 // pred_fallthru
          _
      $region12: #{tpu_custom_call.1} parent=5 // pred_fallthru
        _
      %p155 = scmp.lt.s32.totalorder %s14, 2
      // Predicated region
      $region21: #{tpu_custom_call.1} parent=5 // pred_check
        %p156 = pneg %p155
      $region22: #{tpu_custom_call.1} parent=5 // pred_check_branch
        %158 = sbr.rel (%p156) target = $region24
      $region23: #{tpu_custom_call.1} parent=5 // pred_region
        // Predicated region
        $region25: #{tpu_custom_call.1} parent=23 // pred_check
          %p159 = pneg %p34
        $region26: #{tpu_custom_call.1} parent=23 // pred_check_branch
          %161 = sbr.rel (%p159) target = $region28
        $region27: #{tpu_custom_call.1} parent=23 // pred_region
          %s162 = sand.u32 %s24, 1
          %s163 = sand.u32 %s24, 1
          %s164 = smul.addr %s163, 256
          %s165 = scalar_lea.vmem [#allocation2], %s164
          %s166 = smul.u32 16, %s14
          %s167 = smul.addr %s166, 8
          %s168 = scalar_lea.vmem %s0, %s167
          // Predicated region
          $region29: #{tpu_custom_call.1} parent=27 // pred_check
            _
          $region30: #{tpu_custom_call.1} parent=27 // pred_check_branch
            %170 = sbr.rel (0) target = $region32
          $region31: #{tpu_custom_call.1} parent=27 // pred_region
            // Predicated region
            $region33: #{tpu_custom_call.1} parent=31 // pred_check
              _
            $region34: #{tpu_custom_call.1} parent=31 // pred_check_branch
              %172 = sbr.rel (0) target = $region36
            $region35: #{tpu_custom_call.1} parent=31 // pred_region
              // Predicated region
              $region48: #{tpu_custom_call.1} parent=35 // pred_check
                _
              $region49: #{tpu_custom_call.1} parent=35 // pred_check_branch
                %249 = sbr.rel (0) target = $region51
              $region50: #{tpu_custom_call.1} parent=35 // pred_region
                loop: start=0, step=1, limit=1
                $region52: #{tpu_custom_call.1} parent=50 // loop_pre_header
                  _
                $region53: #{tpu_custom_call.1} parent=50 // loop_header
                  %s251 = sphi 0, %s255
                  %p252 = scmp.ge.s32.totalorder %s251, 1
                  %s256 = sphi %s168, %s168
                  %s257 = sphi %s165, %s165
                $region54: #{tpu_custom_call.1} parent=50 // loop_header_branch
                  %254 = sbr.rel (%p252) target = $region58
                $region55: #{tpu_custom_call.1} parent=50 // loop_body
                  %v258 = vld [vmem:[%s256] sm:$0xff]
                  %259 = vst [vmem:[%s257] sm:$0xff] %v258
                  %v260 = vld [vmem:[%s256 + $0x8] sm:$0xff]
                  %261 = vst [vmem:[%s257 + $0x8] sm:$0xff] %v260
                  %v262 = vld [vmem:[%s256 + $0x10] sm:$0xff]
                  %263 = vst [vmem:[%s257 + $0x10] sm:$0xff] %v262
                  %v264 = vld [vmem:[%s256 + $0x18] sm:$0xff]
                  %265 = vst [vmem:[%s257 + $0x18] sm:$0xff] %v264
                  %v266 = vld [vmem:[%s256 + $0x20] sm:$0xff]
                  %267 = vst [vmem:[%s257 + $0x20] sm:$0xff] %v266
                  %v268 = vld [vmem:[%s256 + $0x28] sm:$0xff]
                  %269 = vst [vmem:[%s257 + $0x28] sm:$0xff] %v268
                  %v270 = vld [vmem:[%s256 + $0x30] sm:$0xff]
                  %271 = vst [vmem:[%s257 + $0x30] sm:$0xff] %v270
                  %v272 = vld [vmem:[%s256 + $0x38] sm:$0xff]
                  %273 = vst [vmem:[%s257 + $0x38] sm:$0xff] %v272
                  %v274 = vld [vmem:[%s256 + $0x40] sm:$0xff]
                  %275 = vst [vmem:[%s257 + $0x40] sm:$0xff] %v274
                  %v276 = vld [vmem:[%s256 + $0x48] sm:$0xff]
                  %277 = vst [vmem:[%s257 + $0x48] sm:$0xff] %v276
                  %v278 = vld [vmem:[%s256 + $0x50] sm:$0xff]
                  %279 = vst [vmem:[%s257 + $0x50] sm:$0xff] %v278
                  %v280 = vld [vmem:[%s256 + $0x58] sm:$0xff]
                  %281 = vst [vmem:[%s257 + $0x58] sm:$0xff] %v280
                  %v282 = vld [vmem:[%s256 + $0x60] sm:$0xff]
                  %283 = vst [vmem:[%s257 + $0x60] sm:$0xff] %v282
                  %v284 = vld [vmem:[%s256 + $0x68] sm:$0xff]
                  %285 = vst [vmem:[%s257 + $0x68] sm:$0xff] %v284
                  %v286 = vld [vmem:[%s256 + $0x70] sm:$0xff]
                  %287 = vst [vmem:[%s257 + $0x70] sm:$0xff] %v286
                  %v288 = vld [vmem:[%s256 + $0x78] sm:$0xff]
                  %289 = vst [vmem:[%s257 + $0x78] sm:$0xff] %v288
                  %v290 = vld [vmem:[%s256 + $0x100] sm:$0xff]
                  %291 = vst [vmem:[%s257 + $0x80] sm:$0xff] %v290
                  %v292 = vld [vmem:[%s256 + $0x108] sm:$0xff]
                  %293 = vst [vmem:[%s257 + $0x88] sm:$0xff] %v292
                  %v294 = vld [vmem:[%s256 + $0x110] sm:$0xff]
                  %295 = vst [vmem:[%s257 + $0x90] sm:$0xff] %v294
                  %v296 = vld [vmem:[%s256 + $0x118] sm:$0xff]
                  %297 = vst [vmem:[%s257 + $0x98] sm:$0xff] %v296
                  %v298 = vld [vmem:[%s256 + $0x120] sm:$0xff]
                  %299 = vst [vmem:[%s257 + $0xa0] sm:$0xff] %v298
                  %v300 = vld [vmem:[%s256 + $0x128] sm:$0xff]
                  %301 = vst [vmem:[%s257 + $0xa8] sm:$0xff] %v300
                  %v302 = vld [vmem:[%s256 + $0x130] sm:$0xff]
                  %303 = vst [vmem:[%s257 + $0xb0] sm:$0xff] %v302
                  %v304 = vld [vmem:[%s256 + $0x138] sm:$0xff]
                  %305 = vst [vmem:[%s257 + $0xb8] sm:$0xff] %v304
                  %v306 = vld [vmem:[%s256 + $0x140] sm:$0xff]
                  %307 = vst [vmem:[%s257 + $0xc0] sm:$0xff] %v306
                  %v308 = vld [vmem:[%s256 + $0x148] sm:$0xff]
                  %309 = vst [vmem:[%s257 + $0xc8] sm:$0xff] %v308
                  %v310 = vld [vmem:[%s256 + $0x150] sm:$0xff]
                  %311 = vst [vmem:[%s257 + $0xd0] sm:$0xff] %v310
                  %v312 = vld [vmem:[%s256 + $0x158] sm:$0xff]
                  %313 = vst [vmem:[%s257 + $0xd8] sm:$0xff] %v312
                  %v314 = vld [vmem:[%s256 + $0x160] sm:$0xff]
                  %315 = vst [vmem:[%s257 + $0xe0] sm:$0xff] %v314
                  %v316 = vld [vmem:[%s256 + $0x168] sm:$0xff]
                  %317 = vst [vmem:[%s257 + $0xe8] sm:$0xff] %v316
                  %v318 = vld [vmem:[%s256 + $0x170] sm:$0xff]
                  %319 = vst [vmem:[%s257 + $0xf0] sm:$0xff] %v318
                  %v320 = vld [vmem:[%s256 + $0x178] sm:$0xff]
                  %321 = vst [vmem:[%s257 + $0xf8] sm:$0xff] %v320
                $region56: #{tpu_custom_call.1} parent=50 // loop_footer
                  %s255 = sadd.s32 1, %s251
                $region57: #{tpu_custom_call.1} parent=50 // loop_footer_branch
                  %250 = sbr.rel target = $region53
                $region58: #{tpu_custom_call.1} parent=50 // loop_exit
                  _
              $region51: #{tpu_custom_call.1} parent=35 // pred_fallthru
                _
              // Predicated region
              $region59: #{tpu_custom_call.1} parent=35 // pred_check
                _
              $region60: #{tpu_custom_call.1} parent=35 // pred_check_branch
                %323 = sbr.rel target = $region62
              $region61: #{tpu_custom_call.1} parent=35 // pred_region
                _
              $region62: #{tpu_custom_call.1} parent=35 // pred_fallthru
                _
            $region36: #{tpu_custom_call.1} parent=31 // pred_fallthru
              _
            // Predicated region
            $region37: #{tpu_custom_call.1} parent=31 // pred_check
              _
            $region38: #{tpu_custom_call.1} parent=31 // pred_check_branch
              %174 = sbr.rel target = $region40
            $region39: #{tpu_custom_call.1} parent=31 // pred_region
              loop: start=0, step=1, limit=1
              $region41: #{tpu_custom_call.1} parent=39 // loop_pre_header
                _
              $region42: #{tpu_custom_call.1} parent=39 // loop_header
                %s177 = sphi 0, %s181
                %p178 = scmp.ge.s32.totalorder %s177, 1
                %s182 = sphi %s168, %s168
                %s183 = sphi %s165, %s165
              $region43: #{tpu_custom_call.1} parent=39 // loop_header_branch
                %180 = sbr.rel (%p178) target = $region47
              $region44: #{tpu_custom_call.1} parent=39 // loop_body
                %v184 = vld [vmem:[%s182] sm:$0xff]
                %185 = vst [vmem:[%s183] sm:$0xff] %v184
                %v186 = vld [vmem:[%s182 + $0x8] sm:$0xff]
                %187 = vst [vmem:[%s183 + $0x8] sm:$0xff] %v186
                %v188 = vld [vmem:[%s182 + $0x10] sm:$0xff]
                %189 = vst [vmem:[%s183 + $0x10] sm:$0xff] %v188
                %v190 = vld [vmem:[%s182 + $0x18] sm:$0xff]
                %191 = vst [vmem:[%s183 + $0x18] sm:$0xff] %v190
                %v192 = vld [vmem:[%s182 + $0x20] sm:$0xff]
                %193 = vst [vmem:[%s183 + $0x20] sm:$0xff] %v192
                %v194 = vld [vmem:[%s182 + $0x28] sm:$0xff]
                %195 = vst [vmem:[%s183 + $0x28] sm:$0xff] %v194
                %v196 = vld [vmem:[%s182 + $0x30] sm:$0xff]
                %197 = vst [vmem:[%s183 + $0x30] sm:$0xff] %v196
                %v198 = vld [vmem:[%s182 + $0x38] sm:$0xff]
                %199 = vst [vmem:[%s183 + $0x38] sm:$0xff] %v198
                %v200 = vld [vmem:[%s182 + $0x40] sm:$0xff]
                %201 = vst [vmem:[%s183 + $0x40] sm:$0xff] %v200
                %v202 = vld [vmem:[%s182 + $0x48] sm:$0xff]
                %203 = vst [vmem:[%s183 + $0x48] sm:$0xff] %v202
                %v204 = vld [vmem:[%s182 + $0x50] sm:$0xff]
                %205 = vst [vmem:[%s183 + $0x50] sm:$0xff] %v204
                %v206 = vld [vmem:[%s182 + $0x58] sm:$0xff]
                %207 = vst [vmem:[%s183 + $0x58] sm:$0xff] %v206
                %v208 = vld [vmem:[%s182 + $0x60] sm:$0xff]
                %209 = vst [vmem:[%s183 + $0x60] sm:$0xff] %v208
                %v210 = vld [vmem:[%s182 + $0x68] sm:$0xff]
                %211 = vst [vmem:[%s183 + $0x68] sm:$0xff] %v210
                %v212 = vld [vmem:[%s182 + $0x70] sm:$0xff]
                %213 = vst [vmem:[%s183 + $0x70] sm:$0xff] %v212
                %v214 = vld [vmem:[%s182 + $0x78] sm:$0xff]
                %215 = vst [vmem:[%s183 + $0x78] sm:$0xff] %v214
                %v216 = vld [vmem:[%s182 + $0x100] sm:$0xff]
                %217 = vst [vmem:[%s183 + $0x80] sm:$0xff] %v216
                %v218 = vld [vmem:[%s182 + $0x108] sm:$0xff]
                %219 = vst [vmem:[%s183 + $0x88] sm:$0xff] %v218
                %v220 = vld [vmem:[%s182 + $0x110] sm:$0xff]
                %221 = vst [vmem:[%s183 + $0x90] sm:$0xff] %v220
                %v222 = vld [vmem:[%s182 + $0x118] sm:$0xff]
                %223 = vst [vmem:[%s183 + $0x98] sm:$0xff] %v222
                %v224 = vld [vmem:[%s182 + $0x120] sm:$0xff]
                %225 = vst [vmem:[%s183 + $0xa0] sm:$0xff] %v224
                %v226 = vld [vmem:[%s182 + $0x128] sm:$0xff]
                %227 = vst [vmem:[%s183 + $0xa8] sm:$0xff] %v226
                %v228 = vld [vmem:[%s182 + $0x130] sm:$0xff]
                %229 = vst [vmem:[%s183 + $0xb0] sm:$0xff] %v228
                %v230 = vld [vmem:[%s182 + $0x138] sm:$0xff]
                %231 = vst [vmem:[%s183 + $0xb8] sm:$0xff] %v230
                %v232 = vld [vmem:[%s182 + $0x140] sm:$0xff]
                %233 = vst [vmem:[%s183 + $0xc0] sm:$0xff] %v232
                %v234 = vld [vmem:[%s182 + $0x148] sm:$0xff]
                %235 = vst [vmem:[%s183 + $0xc8] sm:$0xff] %v234
                %v236 = vld [vmem:[%s182 + $0x150] sm:$0xff]
                %237 = vst [vmem:[%s183 + $0xd0] sm:$0xff] %v236
                %v238 = vld [vmem:[%s182 + $0x158] sm:$0xff]
                %239 = vst [vmem:[%s183 + $0xd8] sm:$0xff] %v238
                %v240 = vld [vmem:[%s182 + $0x160] sm:$0xff]
                %241 = vst [vmem:[%s183 + $0xe0] sm:$0xff] %v240
                %v242 = vld [vmem:[%s182 + $0x168] sm:$0xff]
                %243 = vst [vmem:[%s183 + $0xe8] sm:$0xff] %v242
                %v244 = vld [vmem:[%s182 + $0x170] sm:$0xff]
                %245 = vst [vmem:[%s183 + $0xf0] sm:$0xff] %v244
                %v246 = vld [vmem:[%s182 + $0x178] sm:$0xff]
                %247 = vst [vmem:[%s183 + $0xf8] sm:$0xff] %v246
              $region45: #{tpu_custom_call.1} parent=39 // loop_footer
                %s181 = sadd.s32 1, %s177
              $region46: #{tpu_custom_call.1} parent=39 // loop_footer_branch
                %176 = sbr.rel target = $region42
              $region47: #{tpu_custom_call.1} parent=39 // loop_exit
                _
            $region40: #{tpu_custom_call.1} parent=31 // pred_fallthru
              _
          $region32: #{tpu_custom_call.1} parent=27 // pred_fallthru
            _
          %324 = vnop
        $region28: #{tpu_custom_call.1} parent=23 // pred_fallthru
          _
      $region24: #{tpu_custom_call.1} parent=5 // pred_fallthru
        _
      %p325 = scmp.le.s32.totalorder 1, %s14
      %p326 = scmp.lt.s32.totalorder %s14, 3
      %p327 = pnand %p325, %p326
      %p328 = pneg %p327
      // Predicated region
      $region63: #{tpu_custom_call.1} parent=5 // pred_check
        _
      $region64: #{tpu_custom_call.1} parent=5 // pred_check_branch
        %330 = sbr.rel (%p327) target = $region66
      $region65: #{tpu_custom_call.1} parent=5 // pred_region
        %s331 = ssub.s32 %s14, 1
        %s332 = sand.u32 %s27, 1
        %s333 = sand.u32 %s27, 1
        %s334 = smul.addr %s333, 256
        %s335 = scalar_lea.vmem [#allocation2], %s334
        // Predicated region
        $region67: #{tpu_custom_call.1} parent=65 // pred_check
          %p336 = pneg %p40
        $region68: #{tpu_custom_call.1} parent=65 // pred_check_branch
          %338 = sbr.rel (%p336) target = $region70
        $region69: #{tpu_custom_call.1} parent=65 // pred_region
          _
        $region70: #{tpu_custom_call.1} parent=65 // pred_fallthru
          _
        %s339 = sand.u32 %s27, 1
        %s340 = sand.u32 %s27, 1
        %s341 = smul.addr %s340, 256
        %s342 = scalar_lea.vmem [#allocation2], %s341
        %p343 = pneg %p40
        %p344 = pneg %p37
        %p345 = pneg %p61
        %p346 = pneg %p58
        %p347 = pneg %p82
        %p348 = pneg %p79
        %p349 = pneg %p108
        %p350 = pneg %p105
        %s351 = sand.u32 %s95, 1
        %s352 = sand.u32 %s95, 1
        %s353 = smul.addr %s352, 256
        %s354 = scalar_lea.vmem [#allocation3], %s353
        %p355 = pneg %p134
        %p356 = pneg %p131
        %s357 = sand.u32 %s121, 1
        %s358 = scalar_lea.sflag [#allocation5], %s357
        %s359 = sand.u32 %s121, 1
        %s360 = smul.addr %s359, 2
        %s361 = scalar_lea.vmem [#allocation4], %s360
        %s362 = smul.u32 16, %s19
        %s363 = smul.u32 16, %s19
        %v365 = vld [vmem:[%s335] sm:$0xff]
        %v366 = vld [vmem:[%s335 + $0x8] sm:$0xff]
        %v367 = vld [vmem:[%s335 + $0x10] sm:$0xff]
        %v368 = vld [vmem:[%s335 + $0x18] sm:$0xff]
        %v369 = vld [vmem:[%s335 + $0x20] sm:$0xff]
        %v370 = vld [vmem:[%s335 + $0x28] sm:$0xff]
        %v371 = vld [vmem:[%s335 + $0x30] sm:$0xff]
        %v372 = vld [vmem:[%s335 + $0x38] sm:$0xff]
        %v373 = vld [vmem:[%s335 + $0x40] sm:$0xff]
        %v374 = vld [vmem:[%s335 + $0x48] sm:$0xff]
        %v375 = vld [vmem:[%s335 + $0x50] sm:$0xff]
        %v376 = vld [vmem:[%s335 + $0x58] sm:$0xff]
        %v377 = vld [vmem:[%s335 + $0x60] sm:$0xff]
        %v378 = vld [vmem:[%s335 + $0x68] sm:$0xff]
        %v379 = vld [vmem:[%s335 + $0x70] sm:$0xff]
        %v380 = vld [vmem:[%s335 + $0x78] sm:$0xff]
        %v381 = vld [vmem:[%s335 + $0x80] sm:$0xff]
        %v382 = vld [vmem:[%s335 + $0x88] sm:$0xff]
        %v383 = vld [vmem:[%s335 + $0x90] sm:$0xff]
        %v384 = vld [vmem:[%s335 + $0x98] sm:$0xff]
        %v385 = vld [vmem:[%s335 + $0xa0] sm:$0xff]
        %v386 = vld [vmem:[%s335 + $0xa8] sm:$0xff]
        %v387 = vld [vmem:[%s335 + $0xb0] sm:$0xff]
        %v388 = vld [vmem:[%s335 + $0xb8] sm:$0xff]
        %v389 = vld [vmem:[%s335 + $0xc0] sm:$0xff]
        %v390 = vld [vmem:[%s335 + $0xc8] sm:$0xff]
        %v391 = vld [vmem:[%s335 + $0xd0] sm:$0xff]
        %v392 = vld [vmem:[%s335 + $0xd8] sm:$0xff]
        %v393 = vld [vmem:[%s335 + $0xe0] sm:$0xff]
        %v394 = vld [vmem:[%s335 + $0xe8] sm:$0xff]
        %v395 = vld [vmem:[%s335 + $0xf0] sm:$0xff]
        %v396 = vld [vmem:[%s335 + $0xf8] sm:$0xff]
        %v397 = vld [vmem:[%s1] sm:$0xff]
        %v398 = vld [vmem:[%s1 + $0x8] sm:$0xff]
        %400 = vset.pattern.permute.xlu0 0
        %401 = vperm.xlu0 %400, %v365
        %v402 = vpop.permute.xlu0 %401
        %405 = vset.pattern.permute.xlu0 0
        %406 = vperm.xlu0 %405, %v366
        %v407 = vpop.permute.xlu0 %406
        %410 = vset.pattern.permute.xlu0 0
        %411 = vperm.xlu0 %410, %v367
        %v412 = vpop.permute.xlu0 %411
        %415 = vset.pattern.permute.xlu0 0
        %416 = vperm.xlu0 %415, %v368
        %v417 = vpop.permute.xlu0 %416
        %420 = vset.pattern.permute.xlu0 0
        %421 = vperm.xlu0 %420, %v369
        %v422 = vpop.permute.xlu0 %421
        %425 = vset.pattern.permute.xlu0 0
        %426 = vperm.xlu0 %425, %v370
        %v427 = vpop.permute.xlu0 %426
        %430 = vset.pattern.permute.xlu0 0
        %431 = vperm.xlu0 %430, %v371
        %v432 = vpop.permute.xlu0 %431
        %435 = vset.pattern.permute.xlu0 0
        %436 = vperm.xlu0 %435, %v372
        %v437 = vpop.permute.xlu0 %436
        %440 = vset.pattern.permute.xlu0 0
        %441 = vperm.xlu0 %440, %v373
        %v442 = vpop.permute.xlu0 %441
        %445 = vset.pattern.permute.xlu0 0
        %446 = vperm.xlu0 %445, %v374
        %v447 = vpop.permute.xlu0 %446
        %450 = vset.pattern.permute.xlu0 0
        %451 = vperm.xlu0 %450, %v375
        %v452 = vpop.permute.xlu0 %451
        %455 = vset.pattern.permute.xlu0 0
        %456 = vperm.xlu0 %455, %v376
        %v457 = vpop.permute.xlu0 %456
        %460 = vset.pattern.permute.xlu0 0
        %461 = vperm.xlu0 %460, %v377
        %v462 = vpop.permute.xlu0 %461
        %465 = vset.pattern.permute.xlu0 0
        %466 = vperm.xlu0 %465, %v378
        %v467 = vpop.permute.xlu0 %466
        %470 = vset.pattern.permute.xlu0 0
        %471 = vperm.xlu0 %470, %v379
        %v472 = vpop.permute.xlu0 %471
        %475 = vset.pattern.permute.xlu0 0
        %476 = vperm.xlu0 %475, %v380
        %v477 = vpop.permute.xlu0 %476
        %480 = vset.pattern.permute.xlu0 0
        %481 = vperm.xlu0 %480, %v381
        %v482 = vpop.permute.xlu0 %481
        %485 = vset.pattern.permute.xlu0 0
        %486 = vperm.xlu0 %485, %v382
        %v487 = vpop.permute.xlu0 %486
        %490 = vset.pattern.permute.xlu0 0
        %491 = vperm.xlu0 %490, %v383
        %v492 = vpop.permute.xlu0 %491
        %495 = vset.pattern.permute.xlu0 0
        %496 = vperm.xlu0 %495, %v384
        %v497 = vpop.permute.xlu0 %496
        %500 = vset.pattern.permute.xlu0 0
        %501 = vperm.xlu0 %500, %v385
        %v502 = vpop.permute.xlu0 %501
        %505 = vset.pattern.permute.xlu0 0
        %506 = vperm.xlu0 %505, %v386
        %v507 = vpop.permute.xlu0 %506
        %510 = vset.pattern.permute.xlu0 0
        %511 = vperm.xlu0 %510, %v387
        %v512 = vpop.permute.xlu0 %511
        %515 = vset.pattern.permute.xlu0 0
        %516 = vperm.xlu0 %515, %v388
        %v517 = vpop.permute.xlu0 %516
        %520 = vset.pattern.permute.xlu0 0
        %521 = vperm.xlu0 %520, %v389
        %v522 = vpop.permute.xlu0 %521
        %525 = vset.pattern.permute.xlu0 0
        %526 = vperm.xlu0 %525, %v390
        %v527 = vpop.permute.xlu0 %526
        %530 = vset.pattern.permute.xlu0 0
        %531 = vperm.xlu0 %530, %v391
        %v532 = vpop.permute.xlu0 %531
        %535 = vset.pattern.permute.xlu0 0
        %536 = vperm.xlu0 %535, %v392
        %v537 = vpop.permute.xlu0 %536
        %540 = vset.pattern.permute.xlu0 0
        %541 = vperm.xlu0 %540, %v393
        %v542 = vpop.permute.xlu0 %541
        %545 = vset.pattern.permute.xlu0 0
        %546 = vperm.xlu0 %545, %v394
        %v547 = vpop.permute.xlu0 %546
        %550 = vset.pattern.permute.xlu0 0
        %551 = vperm.xlu0 %550, %v395
        %v552 = vpop.permute.xlu0 %551
        %555 = vset.pattern.permute.xlu0 0
        %556 = vperm.xlu0 %555, %v396
        %v557 = vpop.permute.xlu0 %556
        %v561 = vlaneseq
        %v562 = vshrl.u32 %v561, 7
        %v563 = vsub.s32 0, %v562
        %v564 = vrot.slane %v397, %v563
        %v565 = vlaneseq
        %v566 = vshrl.u32 %v565, 7
        %v567 = vsub.s32 4, %v566
        %v568 = vrot.slane %v397, %v567
        %v569 = vlaneseq
        %v570 = vshrl.u32 %v569, 7
        %v571 = vsub.s32 0, %v570
        %v572 = vrot.slane %v398, %v571
        %v573 = vlaneseq
        %v574 = vshrl.u32 %v573, 7
        %v575 = vsub.s32 4, %v574
        %v576 = vrot.slane %v398, %v575
        %v581 = vlaneseq
        %v582 = vshrl.u32 %v581, 7
        %v583 = vsub.s32 0, %v582
        %v584 = vrot.slane %v564, %v583
        %v585 = vlaneseq
        %v586 = vshrl.u32 %v585, 7
        %v587 = vsub.s32 0, %v586
        %v588 = vrot.slane %v568, %v587
        %v589 = vlaneseq
        %v590 = vshrl.u32 %v589, 7
        %v591 = vsub.s32 0, %v590
        %v592 = vrot.slane %v572, %v591
        %v593 = vlaneseq
        %v594 = vshrl.u32 %v593, 7
        %v595 = vsub.s32 0, %v594
        %v596 = vrot.slane %v576, %v595
        %v597 = vmul.f32 %v402, %v584
        %v598 = vmul.f32 %v402, %v588
        %v599 = vmul.f32 %v407, %v584
        %v600 = vmul.f32 %v407, %v588
        %v601 = vmul.f32 %v412, %v584
        %v602 = vmul.f32 %v412, %v588
        %v603 = vmul.f32 %v417, %v584
        %v604 = vmul.f32 %v417, %v588
        %v605 = vmul.f32 %v422, %v584
        %v606 = vmul.f32 %v422, %v588
        %v607 = vmul.f32 %v427, %v584
        %v608 = vmul.f32 %v427, %v588
        %v609 = vmul.f32 %v432, %v584
        %v610 = vmul.f32 %v432, %v588
        %v611 = vmul.f32 %v437, %v584
        %v612 = vmul.f32 %v437, %v588
        %v613 = vmul.f32 %v442, %v584
        %v614 = vmul.f32 %v442, %v588
        %v615 = vmul.f32 %v447, %v584
        %v616 = vmul.f32 %v447, %v588
        %v617 = vmul.f32 %v452, %v584
        %v618 = vmul.f32 %v452, %v588
        %v619 = vmul.f32 %v457, %v584
        %v620 = vmul.f32 %v457, %v588
        %v621 = vmul.f32 %v462, %v584
        %v622 = vmul.f32 %v462, %v588
        %v623 = vmul.f32 %v467, %v584
        %v624 = vmul.f32 %v467, %v588
        %v625 = vmul.f32 %v472, %v584
        %v626 = vmul.f32 %v472, %v588
        %v627 = vmul.f32 %v477, %v584
        %v628 = vmul.f32 %v477, %v588
        %v629 = vmul.f32 %v482, %v592
        %v630 = vmul.f32 %v482, %v596
        %v631 = vmul.f32 %v487, %v592
        %v632 = vmul.f32 %v487, %v596
        %v633 = vmul.f32 %v492, %v592
        %v634 = vmul.f32 %v492, %v596
        %v635 = vmul.f32 %v497, %v592
        %v636 = vmul.f32 %v497, %v596
        %v637 = vmul.f32 %v502, %v592
        %v638 = vmul.f32 %v502, %v596
        %v639 = vmul.f32 %v507, %v592
        %v640 = vmul.f32 %v507, %v596
        %v641 = vmul.f32 %v512, %v592
        %v642 = vmul.f32 %v512, %v596
        %v643 = vmul.f32 %v517, %v592
        %v644 = vmul.f32 %v517, %v596
        %v645 = vmul.f32 %v522, %v592
        %v646 = vmul.f32 %v522, %v596
        %v647 = vmul.f32 %v527, %v592
        %v648 = vmul.f32 %v527, %v596
        %v649 = vmul.f32 %v532, %v592
        %v650 = vmul.f32 %v532, %v596
        %v651 = vmul.f32 %v537, %v592
        %v652 = vmul.f32 %v537, %v596
        %v653 = vmul.f32 %v542, %v592
        %v654 = vmul.f32 %v542, %v596
        %v655 = vmul.f32 %v547, %v592
        %v656 = vmul.f32 %v547, %v596
        %v657 = vmul.f32 %v552, %v592
        %v658 = vmul.f32 %v552, %v596
        %v659 = vmul.f32 %v557, %v592
        %v660 = vmul.f32 %v557, %v596
        %661 = vset.pattern.permute.xlu0 1
        %662 = vperm.xlu0 %661, %v365
        %v663 = vpop.permute.xlu0 %662
        %665 = vset.pattern.permute.xlu0 1
        %666 = vperm.xlu0 %665, %v366
        %v667 = vpop.permute.xlu0 %666
        %669 = vset.pattern.permute.xlu0 1
        %670 = vperm.xlu0 %669, %v367
        %v671 = vpop.permute.xlu0 %670
        %673 = vset.pattern.permute.xlu0 1
        %674 = vperm.xlu0 %673, %v368
        %v675 = vpop.permute.xlu0 %674
        %677 = vset.pattern.permute.xlu0 1
        %678 = vperm.xlu0 %677, %v369
        %v679 = vpop.permute.xlu0 %678
        %681 = vset.pattern.permute.xlu0 1
        %682 = vperm.xlu0 %681, %v370
        %v683 = vpop.permute.xlu0 %682
        %685 = vset.pattern.permute.xlu0 1
        %686 = vperm.xlu0 %685, %v371
        %v687 = vpop.permute.xlu0 %686
        %689 = vset.pattern.permute.xlu0 1
        %690 = vperm.xlu0 %689, %v372
        %v691 = vpop.permute.xlu0 %690
        %693 = vset.pattern.permute.xlu0 1
        %694 = vperm.xlu0 %693, %v373
        %v695 = vpop.permute.xlu0 %694
        %697 = vset.pattern.permute.xlu0 1
        %698 = vperm.xlu0 %697, %v374
        %v699 = vpop.permute.xlu0 %698
        %701 = vset.pattern.permute.xlu0 1
        %702 = vperm.xlu0 %701, %v375
        %v703 = vpop.permute.xlu0 %702
        %705 = vset.pattern.permute.xlu0 1
        %706 = vperm.xlu0 %705, %v376
        %v707 = vpop.permute.xlu0 %706
        %709 = vset.pattern.permute.xlu0 1
        %710 = vperm.xlu0 %709, %v377
        %v711 = vpop.permute.xlu0 %710
        %713 = vset.pattern.permute.xlu0 1
        %714 = vperm.xlu0 %713, %v378
        %v715 = vpop.permute.xlu0 %714
        %717 = vset.pattern.permute.xlu0 1
        %718 = vperm.xlu0 %717, %v379
        %v719 = vpop.permute.xlu0 %718
        %721 = vset.pattern.permute.xlu0 1
        %722 = vperm.xlu0 %721, %v380
        %v723 = vpop.permute.xlu0 %722
        %725 = vset.pattern.permute.xlu0 1
        %726 = vperm.xlu0 %725, %v381
        %v727 = vpop.permute.xlu0 %726
        %729 = vset.pattern.permute.xlu0 1
        %730 = vperm.xlu0 %729, %v382
        %v731 = vpop.permute.xlu0 %730
        %733 = vset.pattern.permute.xlu0 1
        %734 = vperm.xlu0 %733, %v383
        %v735 = vpop.permute.xlu0 %734
        %737 = vset.pattern.permute.xlu0 1
        %738 = vperm.xlu0 %737, %v384
        %v739 = vpop.permute.xlu0 %738
        %741 = vset.pattern.permute.xlu0 1
        %742 = vperm.xlu0 %741, %v385
        %v743 = vpop.permute.xlu0 %742
        %745 = vset.pattern.permute.xlu0 1
        %746 = vperm.xlu0 %745, %v386
        %v747 = vpop.permute.xlu0 %746
        %749 = vset.pattern.permute.xlu0 1
        %750 = vperm.xlu0 %749, %v387
        %v751 = vpop.permute.xlu0 %750
        %753 = vset.pattern.permute.xlu0 1
        %754 = vperm.xlu0 %753, %v388
        %v755 = vpop.permute.xlu0 %754
        %757 = vset.pattern.permute.xlu0 1
        %758 = vperm.xlu0 %757, %v389
        %v759 = vpop.permute.xlu0 %758
        %761 = vset.pattern.permute.xlu0 1
        %762 = vperm.xlu0 %761, %v390
        %v763 = vpop.permute.xlu0 %762
        %765 = vset.pattern.permute.xlu0 1
        %766 = vperm.xlu0 %765, %v391
        %v767 = vpop.permute.xlu0 %766
        %769 = vset.pattern.permute.xlu0 1
        %770 = vperm.xlu0 %769, %v392
        %v771 = vpop.permute.xlu0 %770
        %773 = vset.pattern.permute.xlu0 1
        %774 = vperm.xlu0 %773, %v393
        %v775 = vpop.permute.xlu0 %774
        %777 = vset.pattern.permute.xlu0 1
        %778 = vperm.xlu0 %777, %v394
        %v779 = vpop.permute.xlu0 %778
        %781 = vset.pattern.permute.xlu0 1
        %782 = vperm.xlu0 %781, %v395
        %v783 = vpop.permute.xlu0 %782
        %785 = vset.pattern.permute.xlu0 1
        %786 = vperm.xlu0 %785, %v396
        %v787 = vpop.permute.xlu0 %786
        %v789 = vlaneseq
        %v790 = vshrl.u32 %v789, 7
        %v791 = vsub.s32 1, %v790
        %v792 = vrot.slane %v397, %v791
        %v793 = vlaneseq
        %v794 = vshrl.u32 %v793, 7
        %v795 = vsub.s32 5, %v794
        %v796 = vrot.slane %v397, %v795
        %v797 = vlaneseq
        %v798 = vshrl.u32 %v797, 7
        %v799 = vsub.s32 1, %v798
        %v800 = vrot.slane %v398, %v799
        %v801 = vlaneseq
        %v802 = vshrl.u32 %v801, 7
        %v803 = vsub.s32 5, %v802
        %v804 = vrot.slane %v398, %v803
        %v809 = vlaneseq
        %v810 = vshrl.u32 %v809, 7
        %v811 = vsub.s32 1, %v810
        %v812 = vrot.slane %v792, %v811
        %v813 = vlaneseq
        %v814 = vshrl.u32 %v813, 7
        %v815 = vsub.s32 1, %v814
        %v816 = vrot.slane %v796, %v815
        %v817 = vlaneseq
        %v818 = vshrl.u32 %v817, 7
        %v819 = vsub.s32 1, %v818
        %v820 = vrot.slane %v800, %v819
        %v821 = vlaneseq
        %v822 = vshrl.u32 %v821, 7
        %v823 = vsub.s32 1, %v822
        %v824 = vrot.slane %v804, %v823
        %v825 = vmul.f32 %v663, %v812
        %v826 = vmul.f32 %v663, %v816
        %v827 = vmul.f32 %v667, %v812
        %v828 = vmul.f32 %v667, %v816
        %v829 = vmul.f32 %v671, %v812
        %v830 = vmul.f32 %v671, %v816
        %v831 = vmul.f32 %v675, %v812
        %v832 = vmul.f32 %v675, %v816
        %v833 = vmul.f32 %v679, %v812
        %v834 = vmul.f32 %v679, %v816
        %v835 = vmul.f32 %v683, %v812
        %v836 = vmul.f32 %v683, %v816
        %v837 = vmul.f32 %v687, %v812
        %v838 = vmul.f32 %v687, %v816
        %v839 = vmul.f32 %v691, %v812
        %v840 = vmul.f32 %v691, %v816
        %v841 = vmul.f32 %v695, %v812
        %v842 = vmul.f32 %v695, %v816
        %v843 = vmul.f32 %v699, %v812
        %v844 = vmul.f32 %v699, %v816
        %v845 = vmul.f32 %v703, %v812
        %v846 = vmul.f32 %v703, %v816
        %v847 = vmul.f32 %v707, %v812
        %v848 = vmul.f32 %v707, %v816
        %v849 = vmul.f32 %v711, %v812
        %v850 = vmul.f32 %v711, %v816
        %v851 = vmul.f32 %v715, %v812
        %v852 = vmul.f32 %v715, %v816
        %v853 = vmul.f32 %v719, %v812
        %v854 = vmul.f32 %v719, %v816
        %v855 = vmul.f32 %v723, %v812
        %v856 = vmul.f32 %v723, %v816
        %v857 = vmul.f32 %v727, %v820
        %v858 = vmul.f32 %v727, %v824
        %v859 = vmul.f32 %v731, %v820
        %v860 = vmul.f32 %v731, %v824
        %v861 = vmul.f32 %v735, %v820
        %v862 = vmul.f32 %v735, %v824
        %v863 = vmul.f32 %v739, %v820
        %v864 = vmul.f32 %v739, %v824
        %v865 = vmul.f32 %v743, %v820
        %v866 = vmul.f32 %v743, %v824
        %v867 = vmul.f32 %v747, %v820
        %v868 = vmul.f32 %v747, %v824
        %v869 = vmul.f32 %v751, %v820
        %v870 = vmul.f32 %v751, %v824
        %v871 = vmul.f32 %v755, %v820
        %v872 = vmul.f32 %v755, %v824
        %v873 = vmul.f32 %v759, %v820
        %v874 = vmul.f32 %v759, %v824
        %v875 = vmul.f32 %v763, %v820
        %v876 = vmul.f32 %v763, %v824
        %v877 = vmul.f32 %v767, %v820
        %v878 = vmul.f32 %v767, %v824
        %v879 = vmul.f32 %v771, %v820
        %v880 = vmul.f32 %v771, %v824
        %v881 = vmul.f32 %v775, %v820
        %v882 = vmul.f32 %v775, %v824
        %v883 = vmul.f32 %v779, %v820
        %v884 = vmul.f32 %v779, %v824
        %v885 = vmul.f32 %v783, %v820
        %v886 = vmul.f32 %v783, %v824
        %v887 = vmul.f32 %v787, %v820
        %v888 = vmul.f32 %v787, %v824
        %v889 = vadd.f32 %v597, %v825
        %v890 = vadd.f32 %v598, %v826
        %v891 = vadd.f32 %v599, %v827
        %v892 = vadd.f32 %v600, %v828
        %v893 = vadd.f32 %v601, %v829
        %v894 = vadd.f32 %v602, %v830
        %v895 = vadd.f32 %v603, %v831
        %v896 = vadd.f32 %v604, %v832
        %v897 = vadd.f32 %v605, %v833
        %v898 = vadd.f32 %v606, %v834
        %v899 = vadd.f32 %v607, %v835
        %v900 = vadd.f32 %v608, %v836
        %v901 = vadd.f32 %v609, %v837
        %v902 = vadd.f32 %v610, %v838
        %v903 = vadd.f32 %v611, %v839
        %v904 = vadd.f32 %v612, %v840
        %v905 = vadd.f32 %v613, %v841
        %v906 = vadd.f32 %v614, %v842
        %v907 = vadd.f32 %v615, %v843
        %v908 = vadd.f32 %v616, %v844
        %v909 = vadd.f32 %v617, %v845
        %v910 = vadd.f32 %v618, %v846
        %v911 = vadd.f32 %v619, %v847
        %v912 = vadd.f32 %v620, %v848
        %v913 = vadd.f32 %v621, %v849
        %v914 = vadd.f32 %v622, %v850
        %v915 = vadd.f32 %v623, %v851
        %v916 = vadd.f32 %v624, %v852
        %v917 = vadd.f32 %v625, %v853
        %v918 = vadd.f32 %v626, %v854
        %v919 = vadd.f32 %v627, %v855
        %v920 = vadd.f32 %v628, %v856
        %v921 = vadd.f32 %v629, %v857
        %v922 = vadd.f32 %v630, %v858
        %v923 = vadd.f32 %v631, %v859
        %v924 = vadd.f32 %v632, %v860
        %v925 = vadd.f32 %v633, %v861
        %v926 = vadd.f32 %v634, %v862
        %v927 = vadd.f32 %v635, %v863
        %v928 = vadd.f32 %v636, %v864
        %v929 = vadd.f32 %v637, %v865
        %v930 = vadd.f32 %v638, %v866
        %v931 = vadd.f32 %v639, %v867
        %v932 = vadd.f32 %v640, %v868
        %v933 = vadd.f32 %v641, %v869
        %v934 = vadd.f32 %v642, %v870
        %v935 = vadd.f32 %v643, %v871
        %v936 = vadd.f32 %v644, %v872
        %v937 = vadd.f32 %v645, %v873
        %v938 = vadd.f32 %v646, %v874
        %v939 = vadd.f32 %v647, %v875
        %v940 = vadd.f32 %v648, %v876
        %v941 = vadd.f32 %v649, %v877
        %v942 = vadd.f32 %v650, %v878
        %v943 = vadd.f32 %v651, %v879
        %v944 = vadd.f32 %v652, %v880
        %v945 = vadd.f32 %v653, %v881
        %v946 = vadd.f32 %v654, %v882
        %v947 = vadd.f32 %v655, %v883
        %v948 = vadd.f32 %v656, %v884
        %v949 = vadd.f32 %v657, %v885
        %v950 = vadd.f32 %v658, %v886
        %v951 = vadd.f32 %v659, %v887
        %v952 = vadd.f32 %v660, %v888
        %953 = vset.pattern.permute.xlu0 2
        %954 = vperm.xlu0 %953, %v365
        %v955 = vpop.permute.xlu0 %954
        %957 = vset.pattern.permute.xlu0 2
        %958 = vperm.xlu0 %957, %v366
        %v959 = vpop.permute.xlu0 %958
        %961 = vset.pattern.permute.xlu0 2
        %962 = vperm.xlu0 %961, %v367
        %v963 = vpop.permute.xlu0 %962
        %965 = vset.pattern.permute.xlu0 2
        %966 = vperm.xlu0 %965, %v368
        %v967 = vpop.permute.xlu0 %966
        %969 = vset.pattern.permute.xlu0 2
        %970 = vperm.xlu0 %969, %v369
        %v971 = vpop.permute.xlu0 %970
        %973 = vset.pattern.permute.xlu0 2
        %974 = vperm.xlu0 %973, %v370
        %v975 = vpop.permute.xlu0 %974
        %977 = vset.pattern.permute.xlu0 2
        %978 = vperm.xlu0 %977, %v371
        %v979 = vpop.permute.xlu0 %978
        %981 = vset.pattern.permute.xlu0 2
        %982 = vperm.xlu0 %981, %v372
        %v983 = vpop.permute.xlu0 %982
        %985 = vset.pattern.permute.xlu0 2
        %986 = vperm.xlu0 %985, %v373
        %v987 = vpop.permute.xlu0 %986
        %989 = vset.pattern.permute.xlu0 2
        %990 = vperm.xlu0 %989, %v374
        %v991 = vpop.permute.xlu0 %990
        %993 = vset.pattern.permute.xlu0 2
        %994 = vperm.xlu0 %993, %v375
        %v995 = vpop.permute.xlu0 %994
        %997 = vset.pattern.permute.xlu0 2
        %998 = vperm.xlu0 %997, %v376
        %v999 = vpop.permute.xlu0 %998
        %1001 = vset.pattern.permute.xlu0 2
        %1002 = vperm.xlu0 %1001, %v377
        %v1003 = vpop.permute.xlu0 %1002
        %1005 = vset.pattern.permute.xlu0 2
        %1006 = vperm.xlu0 %1005, %v378
        %v1007 = vpop.permute.xlu0 %1006
        %1009 = vset.pattern.permute.xlu0 2
        %1010 = vperm.xlu0 %1009, %v379
        %v1011 = vpop.permute.xlu0 %1010
        %1013 = vset.pattern.permute.xlu0 2
        %1014 = vperm.xlu0 %1013, %v380
        %v1015 = vpop.permute.xlu0 %1014
        %1017 = vset.pattern.permute.xlu0 2
        %1018 = vperm.xlu0 %1017, %v381
        %v1019 = vpop.permute.xlu0 %1018
        %1021 = vset.pattern.permute.xlu0 2
        %1022 = vperm.xlu0 %1021, %v382
        %v1023 = vpop.permute.xlu0 %1022
        %1025 = vset.pattern.permute.xlu0 2
        %1026 = vperm.xlu0 %1025, %v383
        %v1027 = vpop.permute.xlu0 %1026
        %1029 = vset.pattern.permute.xlu0 2
        %1030 = vperm.xlu0 %1029, %v384
        %v1031 = vpop.permute.xlu0 %1030
        %1033 = vset.pattern.permute.xlu0 2
        %1034 = vperm.xlu0 %1033, %v385
        %v1035 = vpop.permute.xlu0 %1034
        %1037 = vset.pattern.permute.xlu0 2
        %1038 = vperm.xlu0 %1037, %v386
        %v1039 = vpop.permute.xlu0 %1038
        %1041 = vset.pattern.permute.xlu0 2
        %1042 = vperm.xlu0 %1041, %v387
        %v1043 = vpop.permute.xlu0 %1042
        %1045 = vset.pattern.permute.xlu0 2
        %1046 = vperm.xlu0 %1045, %v388
        %v1047 = vpop.permute.xlu0 %1046
        %1049 = vset.pattern.permute.xlu0 2
        %1050 = vperm.xlu0 %1049, %v389
        %v1051 = vpop.permute.xlu0 %1050
        %1053 = vset.pattern.permute.xlu0 2
        %1054 = vperm.xlu0 %1053, %v390
        %v1055 = vpop.permute.xlu0 %1054
        %1057 = vset.pattern.permute.xlu0 2
        %1058 = vperm.xlu0 %1057, %v391
        %v1059 = vpop.permute.xlu0 %1058
        %1061 = vset.pattern.permute.xlu0 2
        %1062 = vperm.xlu0 %1061, %v392
        %v1063 = vpop.permute.xlu0 %1062
        %1065 = vset.pattern.permute.xlu0 2
        %1066 = vperm.xlu0 %1065, %v393
        %v1067 = vpop.permute.xlu0 %1066
        %1069 = vset.pattern.permute.xlu0 2
        %1070 = vperm.xlu0 %1069, %v394
        %v1071 = vpop.permute.xlu0 %1070
        %1073 = vset.pattern.permute.xlu0 2
        %1074 = vperm.xlu0 %1073, %v395
        %v1075 = vpop.permute.xlu0 %1074
        %1077 = vset.pattern.permute.xlu0 2
        %1078 = vperm.xlu0 %1077, %v396
        %v1079 = vpop.permute.xlu0 %1078
        %v1081 = vlaneseq
        %v1082 = vshrl.u32 %v1081, 7
        %v1083 = vsub.s32 2, %v1082
        %v1084 = vrot.slane %v397, %v1083
        %v1085 = vlaneseq
        %v1086 = vshrl.u32 %v1085, 7
        %v1087 = vsub.s32 6, %v1086
        %v1088 = vrot.slane %v397, %v1087
        %v1089 = vlaneseq
        %v1090 = vshrl.u32 %v1089, 7
        %v1091 = vsub.s32 2, %v1090
        %v1092 = vrot.slane %v398, %v1091
        %v1093 = vlaneseq
        %v1094 = vshrl.u32 %v1093, 7
        %v1095 = vsub.s32 6, %v1094
        %v1096 = vrot.slane %v398, %v1095
        %v1101 = vlaneseq
        %v1102 = vshrl.u32 %v1101, 7
        %v1103 = vsub.s32 2, %v1102
        %v1104 = vrot.slane %v1084, %v1103
        %v1105 = vlaneseq
        %v1106 = vshrl.u32 %v1105, 7
        %v1107 = vsub.s32 2, %v1106
        %v1108 = vrot.slane %v1088, %v1107
        %v1109 = vlaneseq
        %v1110 = vshrl.u32 %v1109, 7
        %v1111 = vsub.s32 2, %v1110
        %v1112 = vrot.slane %v1092, %v1111
        %v1113 = vlaneseq
        %v1114 = vshrl.u32 %v1113, 7
        %v1115 = vsub.s32 2, %v1114
        %v1116 = vrot.slane %v1096, %v1115
        %v1117 = vmul.f32 %v955, %v1104
        %v1118 = vmul.f32 %v955, %v1108
        %v1119 = vmul.f32 %v959, %v1104
        %v1120 = vmul.f32 %v959, %v1108
        %v1121 = vmul.f32 %v963, %v1104
        %v1122 = vmul.f32 %v963, %v1108
        %v1123 = vmul.f32 %v967, %v1104
        %v1124 = vmul.f32 %v967, %v1108
        %v1125 = vmul.f32 %v971, %v1104
        %v1126 = vmul.f32 %v971, %v1108
        %v1127 = vmul.f32 %v975, %v1104
        %v1128 = vmul.f32 %v975, %v1108
        %v1129 = vmul.f32 %v979, %v1104
        %v1130 = vmul.f32 %v979, %v1108
        %v1131 = vmul.f32 %v983, %v1104
        %v1132 = vmul.f32 %v983, %v1108
        %v1133 = vmul.f32 %v987, %v1104
        %v1134 = vmul.f32 %v987, %v1108
        %v1135 = vmul.f32 %v991, %v1104
        %v1136 = vmul.f32 %v991, %v1108
        %v1137 = vmul.f32 %v995, %v1104
        %v1138 = vmul.f32 %v995, %v1108
        %v1139 = vmul.f32 %v999, %v1104
        %v1140 = vmul.f32 %v999, %v1108
        %v1141 = vmul.f32 %v1003, %v1104
        %v1142 = vmul.f32 %v1003, %v1108
        %v1143 = vmul.f32 %v1007, %v1104
        %v1144 = vmul.f32 %v1007, %v1108
        %v1145 = vmul.f32 %v1011, %v1104
        %v1146 = vmul.f32 %v1011, %v1108
        %v1147 = vmul.f32 %v1015, %v1104
        %v1148 = vmul.f32 %v1015, %v1108
        %v1149 = vmul.f32 %v1019, %v1112
        %v1150 = vmul.f32 %v1019, %v1116
        %v1151 = vmul.f32 %v1023, %v1112
        %v1152 = vmul.f32 %v1023, %v1116
        %v1153 = vmul.f32 %v1027, %v1112
        %v1154 = vmul.f32 %v1027, %v1116
        %v1155 = vmul.f32 %v1031, %v1112
        %v1156 = vmul.f32 %v1031, %v1116
        %v1157 = vmul.f32 %v1035, %v1112
        %v1158 = vmul.f32 %v1035, %v1116
        %v1159 = vmul.f32 %v1039, %v1112
        %v1160 = vmul.f32 %v1039, %v1116
        %v1161 = vmul.f32 %v1043, %v1112
        %v1162 = vmul.f32 %v1043, %v1116
        %v1163 = vmul.f32 %v1047, %v1112
        %v1164 = vmul.f32 %v1047, %v1116
        %v1165 = vmul.f32 %v1051, %v1112
        %v1166 = vmul.f32 %v1051, %v1116
        %v1167 = vmul.f32 %v1055, %v1112
        %v1168 = vmul.f32 %v1055, %v1116
        %v1169 = vmul.f32 %v1059, %v1112
        %v1170 = vmul.f32 %v1059, %v1116
        %v1171 = vmul.f32 %v1063, %v1112
        %v1172 = vmul.f32 %v1063, %v1116
        %v1173 = vmul.f32 %v1067, %v1112
        %v1174 = vmul.f32 %v1067, %v1116
        %v1175 = vmul.f32 %v1071, %v1112
        %v1176 = vmul.f32 %v1071, %v1116
        %v1177 = vmul.f32 %v1075, %v1112
        %v1178 = vmul.f32 %v1075, %v1116
        %v1179 = vmul.f32 %v1079, %v1112
        %v1180 = vmul.f32 %v1079, %v1116
        %v1181 = vadd.f32 %v889, %v1117
        %v1182 = vadd.f32 %v890, %v1118
        %v1183 = vadd.f32 %v891, %v1119
        %v1184 = vadd.f32 %v892, %v1120
        %v1185 = vadd.f32 %v893, %v1121
        %v1186 = vadd.f32 %v894, %v1122
        %v1187 = vadd.f32 %v895, %v1123
        %v1188 = vadd.f32 %v896, %v1124
        %v1189 = vadd.f32 %v897, %v1125
        %v1190 = vadd.f32 %v898, %v1126
        %v1191 = vadd.f32 %v899, %v1127
        %v1192 = vadd.f32 %v900, %v1128
        %v1193 = vadd.f32 %v901, %v1129
        %v1194 = vadd.f32 %v902, %v1130
        %v1195 = vadd.f32 %v903, %v1131
        %v1196 = vadd.f32 %v904, %v1132
        %v1197 = vadd.f32 %v905, %v1133
        %v1198 = vadd.f32 %v906, %v1134
        %v1199 = vadd.f32 %v907, %v1135
        %v1200 = vadd.f32 %v908, %v1136
        %v1201 = vadd.f32 %v909, %v1137
        %v1202 = vadd.f32 %v910, %v1138
        %v1203 = vadd.f32 %v911, %v1139
        %v1204 = vadd.f32 %v912, %v1140
        %v1205 = vadd.f32 %v913, %v1141
        %v1206 = vadd.f32 %v914, %v1142
        %v1207 = vadd.f32 %v915, %v1143
        %v1208 = vadd.f32 %v916, %v1144
        %v1209 = vadd.f32 %v917, %v1145
        %v1210 = vadd.f32 %v918, %v1146
        %v1211 = vadd.f32 %v919, %v1147
        %v1212 = vadd.f32 %v920, %v1148
        %v1213 = vadd.f32 %v921, %v1149
        %v1214 = vadd.f32 %v922, %v1150
        %v1215 = vadd.f32 %v923, %v1151
        %v1216 = vadd.f32 %v924, %v1152
        %v1217 = vadd.f32 %v925, %v1153
        %v1218 = vadd.f32 %v926, %v1154
        %v1219 = vadd.f32 %v927, %v1155
        %v1220 = vadd.f32 %v928, %v1156
        %v1221 = vadd.f32 %v929, %v1157
        %v1222 = vadd.f32 %v930, %v1158
        %v1223 = vadd.f32 %v931, %v1159
        %v1224 = vadd.f32 %v932, %v1160
        %v1225 = vadd.f32 %v933, %v1161
        %v1226 = vadd.f32 %v934, %v1162
        %v1227 = vadd.f32 %v935, %v1163
        %v1228 = vadd.f32 %v936, %v1164
        %v1229 = vadd.f32 %v937, %v1165
        %v1230 = vadd.f32 %v938, %v1166
        %v1231 = vadd.f32 %v939, %v1167
        %v1232 = vadd.f32 %v940, %v1168
        %v1233 = vadd.f32 %v941, %v1169
        %v1234 = vadd.f32 %v942, %v1170
        %v1235 = vadd.f32 %v943, %v1171
        %v1236 = vadd.f32 %v944, %v1172
        %v1237 = vadd.f32 %v945, %v1173
        %v1238 = vadd.f32 %v946, %v1174
        %v1239 = vadd.f32 %v947, %v1175
        %v1240 = vadd.f32 %v948, %v1176
        %v1241 = vadd.f32 %v949, %v1177
        %v1242 = vadd.f32 %v950, %v1178
        %v1243 = vadd.f32 %v951, %v1179
        %v1244 = vadd.f32 %v952, %v1180
        %1245 = vset.pattern.permute.xlu0 3
        %1246 = vperm.xlu0 %1245, %v365
        %v1247 = vpop.permute.xlu0 %1246
        %1249 = vset.pattern.permute.xlu0 3
        %1250 = vperm.xlu0 %1249, %v366
        %v1251 = vpop.permute.xlu0 %1250
        %1253 = vset.pattern.permute.xlu0 3
        %1254 = vperm.xlu0 %1253, %v367
        %v1255 = vpop.permute.xlu0 %1254
        %1257 = vset.pattern.permute.xlu0 3
        %1258 = vperm.xlu0 %1257, %v368
        %v1259 = vpop.permute.xlu0 %1258
        %1261 = vset.pattern.permute.xlu0 3
        %1262 = vperm.xlu0 %1261, %v369
        %v1263 = vpop.permute.xlu0 %1262
        %1265 = vset.pattern.permute.xlu0 3
        %1266 = vperm.xlu0 %1265, %v370
        %v1267 = vpop.permute.xlu0 %1266
        %1269 = vset.pattern.permute.xlu0 3
        %1270 = vperm.xlu0 %1269, %v371
        %v1271 = vpop.permute.xlu0 %1270
        %1273 = vset.pattern.permute.xlu0 3
        %1274 = vperm.xlu0 %1273, %v372
        %v1275 = vpop.permute.xlu0 %1274
        %1277 = vset.pattern.permute.xlu0 3
        %1278 = vperm.xlu0 %1277, %v373
        %v1279 = vpop.permute.xlu0 %1278
        %1281 = vset.pattern.permute.xlu0 3
        %1282 = vperm.xlu0 %1281, %v374
        %v1283 = vpop.permute.xlu0 %1282
        %1285 = vset.pattern.permute.xlu0 3
        %1286 = vperm.xlu0 %1285, %v375
        %v1287 = vpop.permute.xlu0 %1286
        %1289 = vset.pattern.permute.xlu0 3
        %1290 = vperm.xlu0 %1289, %v376
        %v1291 = vpop.permute.xlu0 %1290
        %1293 = vset.pattern.permute.xlu0 3
        %1294 = vperm.xlu0 %1293, %v377
        %v1295 = vpop.permute.xlu0 %1294
        %1297 = vset.pattern.permute.xlu0 3
        %1298 = vperm.xlu0 %1297, %v378
        %v1299 = vpop.permute.xlu0 %1298
        %1301 = vset.pattern.permute.xlu0 3
        %1302 = vperm.xlu0 %1301, %v379
        %v1303 = vpop.permute.xlu0 %1302
        %1305 = vset.pattern.permute.xlu0 3
        %1306 = vperm.xlu0 %1305, %v380
        %v1307 = vpop.permute.xlu0 %1306
        %1309 = vset.pattern.permute.xlu0 3
        %1310 = vperm.xlu0 %1309, %v381
        %v1311 = vpop.permute.xlu0 %1310
        %1313 = vset.pattern.permute.xlu0 3
        %1314 = vperm.xlu0 %1313, %v382
        %v1315 = vpop.permute.xlu0 %1314
        %1317 = vset.pattern.permute.xlu0 3
        %1318 = vperm.xlu0 %1317, %v383
        %v1319 = vpop.permute.xlu0 %1318
        %1321 = vset.pattern.permute.xlu0 3
        %1322 = vperm.xlu0 %1321, %v384
        %v1323 = vpop.permute.xlu0 %1322
        %1325 = vset.pattern.permute.xlu0 3
        %1326 = vperm.xlu0 %1325, %v385
        %v1327 = vpop.permute.xlu0 %1326
        %1329 = vset.pattern.permute.xlu0 3
        %1330 = vperm.xlu0 %1329, %v386
        %v1331 = vpop.permute.xlu0 %1330
        %1333 = vset.pattern.permute.xlu0 3
        %1334 = vperm.xlu0 %1333, %v387
        %v1335 = vpop.permute.xlu0 %1334
        %1337 = vset.pattern.permute.xlu0 3
        %1338 = vperm.xlu0 %1337, %v388
        %v1339 = vpop.permute.xlu0 %1338
        %1341 = vset.pattern.permute.xlu0 3
        %1342 = vperm.xlu0 %1341, %v389
        %v1343 = vpop.permute.xlu0 %1342
        %1345 = vset.pattern.permute.xlu0 3
        %1346 = vperm.xlu0 %1345, %v390
        %v1347 = vpop.permute.xlu0 %1346
        %1349 = vset.pattern.permute.xlu0 3
        %1350 = vperm.xlu0 %1349, %v391
        %v1351 = vpop.permute.xlu0 %1350
        %1353 = vset.pattern.permute.xlu0 3
        %1354 = vperm.xlu0 %1353, %v392
        %v1355 = vpop.permute.xlu0 %1354
        %1357 = vset.pattern.permute.xlu0 3
        %1358 = vperm.xlu0 %1357, %v393
        %v1359 = vpop.permute.xlu0 %1358
        %1361 = vset.pattern.permute.xlu0 3
        %1362 = vperm.xlu0 %1361, %v394
        %v1363 = vpop.permute.xlu0 %1362
        %1365 = vset.pattern.permute.xlu0 3
        %1366 = vperm.xlu0 %1365, %v395
        %v1367 = vpop.permute.xlu0 %1366
        %1369 = vset.pattern.permute.xlu0 3
        %1370 = vperm.xlu0 %1369, %v396
        %v1371 = vpop.permute.xlu0 %1370
        %v1373 = vlaneseq
        %v1374 = vshrl.u32 %v1373, 7
        %v1375 = vsub.s32 3, %v1374
        %v1376 = vrot.slane %v397, %v1375
        %v1377 = vlaneseq
        %v1378 = vshrl.u32 %v1377, 7
        %v1379 = vsub.s32 7, %v1378
        %v1380 = vrot.slane %v397, %v1379
        %v1381 = vlaneseq
        %v1382 = vshrl.u32 %v1381, 7
        %v1383 = vsub.s32 3, %v1382
        %v1384 = vrot.slane %v398, %v1383
        %v1385 = vlaneseq
        %v1386 = vshrl.u32 %v1385, 7
        %v1387 = vsub.s32 7, %v1386
        %v1388 = vrot.slane %v398, %v1387
        %v1393 = vlaneseq
        %v1394 = vshrl.u32 %v1393, 7
        %v1395 = vsub.s32 3, %v1394
        %v1396 = vrot.slane %v1376, %v1395
        %v1397 = vlaneseq
        %v1398 = vshrl.u32 %v1397, 7
        %v1399 = vsub.s32 3, %v1398
        %v1400 = vrot.slane %v1380, %v1399
        %v1401 = vlaneseq
        %v1402 = vshrl.u32 %v1401, 7
        %v1403 = vsub.s32 3, %v1402
        %v1404 = vrot.slane %v1384, %v1403
        %v1405 = vlaneseq
        %v1406 = vshrl.u32 %v1405, 7
        %v1407 = vsub.s32 3, %v1406
        %v1408 = vrot.slane %v1388, %v1407
        %v1409 = vmul.f32 %v1247, %v1396
        %v1410 = vmul.f32 %v1247, %v1400
        %v1411 = vmul.f32 %v1251, %v1396
        %v1412 = vmul.f32 %v1251, %v1400
        %v1413 = vmul.f32 %v1255, %v1396
        %v1414 = vmul.f32 %v1255, %v1400
        %v1415 = vmul.f32 %v1259, %v1396
        %v1416 = vmul.f32 %v1259, %v1400
        %v1417 = vmul.f32 %v1263, %v1396
        %v1418 = vmul.f32 %v1263, %v1400
        %v1419 = vmul.f32 %v1267, %v1396
        %v1420 = vmul.f32 %v1267, %v1400
        %v1421 = vmul.f32 %v1271, %v1396
        %v1422 = vmul.f32 %v1271, %v1400
        %v1423 = vmul.f32 %v1275, %v1396
        %v1424 = vmul.f32 %v1275, %v1400
        %v1425 = vmul.f32 %v1279, %v1396
        %v1426 = vmul.f32 %v1279, %v1400
        %v1427 = vmul.f32 %v1283, %v1396
        %v1428 = vmul.f32 %v1283, %v1400
        %v1429 = vmul.f32 %v1287, %v1396
        %v1430 = vmul.f32 %v1287, %v1400
        %v1431 = vmul.f32 %v1291, %v1396
        %v1432 = vmul.f32 %v1291, %v1400
        %v1433 = vmul.f32 %v1295, %v1396
        %v1434 = vmul.f32 %v1295, %v1400
        %v1435 = vmul.f32 %v1299, %v1396
        %v1436 = vmul.f32 %v1299, %v1400
        %v1437 = vmul.f32 %v1303, %v1396
        %v1438 = vmul.f32 %v1303, %v1400
        %v1439 = vmul.f32 %v1307, %v1396
        %v1440 = vmul.f32 %v1307, %v1400
        %v1441 = vmul.f32 %v1311, %v1404
        %v1442 = vmul.f32 %v1311, %v1408
        %v1443 = vmul.f32 %v1315, %v1404
        %v1444 = vmul.f32 %v1315, %v1408
        %v1445 = vmul.f32 %v1319, %v1404
        %v1446 = vmul.f32 %v1319, %v1408
        %v1447 = vmul.f32 %v1323, %v1404
        %v1448 = vmul.f32 %v1323, %v1408
        %v1449 = vmul.f32 %v1327, %v1404
        %v1450 = vmul.f32 %v1327, %v1408
        %v1451 = vmul.f32 %v1331, %v1404
        %v1452 = vmul.f32 %v1331, %v1408
        %v1453 = vmul.f32 %v1335, %v1404
        %v1454 = vmul.f32 %v1335, %v1408
        %v1455 = vmul.f32 %v1339, %v1404
        %v1456 = vmul.f32 %v1339, %v1408
        %v1457 = vmul.f32 %v1343, %v1404
        %v1458 = vmul.f32 %v1343, %v1408
        %v1459 = vmul.f32 %v1347, %v1404
        %v1460 = vmul.f32 %v1347, %v1408
        %v1461 = vmul.f32 %v1351, %v1404
        %v1462 = vmul.f32 %v1351, %v1408
        %v1463 = vmul.f32 %v1355, %v1404
        %v1464 = vmul.f32 %v1355, %v1408
        %v1465 = vmul.f32 %v1359, %v1404
        %v1466 = vmul.f32 %v1359, %v1408
        %v1467 = vmul.f32 %v1363, %v1404
        %v1468 = vmul.f32 %v1363, %v1408
        %v1469 = vmul.f32 %v1367, %v1404
        %v1470 = vmul.f32 %v1367, %v1408
        %v1471 = vmul.f32 %v1371, %v1404
        %v1472 = vmul.f32 %v1371, %v1408
        %v1473 = vadd.f32 %v1181, %v1409
        %v1474 = vadd.f32 %v1182, %v1410
        %v1475 = vadd.f32 %v1183, %v1411
        %v1476 = vadd.f32 %v1184, %v1412
        %v1477 = vadd.f32 %v1185, %v1413
        %v1478 = vadd.f32 %v1186, %v1414
        %v1479 = vadd.f32 %v1187, %v1415
        %v1480 = vadd.f32 %v1188, %v1416
        %v1481 = vadd.f32 %v1189, %v1417
        %v1482 = vadd.f32 %v1190, %v1418
        %v1483 = vadd.f32 %v1191, %v1419
        %v1484 = vadd.f32 %v1192, %v1420
        %v1485 = vadd.f32 %v1193, %v1421
        %v1486 = vadd.f32 %v1194, %v1422
        %v1487 = vadd.f32 %v1195, %v1423
        %v1488 = vadd.f32 %v1196, %v1424
        %v1489 = vadd.f32 %v1197, %v1425
        %v1490 = vadd.f32 %v1198, %v1426
        %v1491 = vadd.f32 %v1199, %v1427
        %v1492 = vadd.f32 %v1200, %v1428
        %v1493 = vadd.f32 %v1201, %v1429
        %v1494 = vadd.f32 %v1202, %v1430
        %v1495 = vadd.f32 %v1203, %v1431
        %v1496 = vadd.f32 %v1204, %v1432
        %v1497 = vadd.f32 %v1205, %v1433
        %v1498 = vadd.f32 %v1206, %v1434
        %v1499 = vadd.f32 %v1207, %v1435
        %v1500 = vadd.f32 %v1208, %v1436
        %v1501 = vadd.f32 %v1209, %v1437
        %v1502 = vadd.f32 %v1210, %v1438
        %v1503 = vadd.f32 %v1211, %v1439
        %v1504 = vadd.f32 %v1212, %v1440
        %v1505 = vadd.f32 %v1213, %v1441
        %v1506 = vadd.f32 %v1214, %v1442
        %v1507 = vadd.f32 %v1215, %v1443
        %v1508 = vadd.f32 %v1216, %v1444
        %v1509 = vadd.f32 %v1217, %v1445
        %v1510 = vadd.f32 %v1218, %v1446
        %v1511 = vadd.f32 %v1219, %v1447
        %v1512 = vadd.f32 %v1220, %v1448
        %v1513 = vadd.f32 %v1221, %v1449
        %v1514 = vadd.f32 %v1222, %v1450
        %v1515 = vadd.f32 %v1223, %v1451
        %v1516 = vadd.f32 %v1224, %v1452
        %v1517 = vadd.f32 %v1225, %v1453
        %v1518 = vadd.f32 %v1226, %v1454
        %v1519 = vadd.f32 %v1227, %v1455
        %v1520 = vadd.f32 %v1228, %v1456
        %v1521 = vadd.f32 %v1229, %v1457
        %v1522 = vadd.f32 %v1230, %v1458
        %v1523 = vadd.f32 %v1231, %v1459
        %v1524 = vadd.f32 %v1232, %v1460
        %v1525 = vadd.f32 %v1233, %v1461
        %v1526 = vadd.f32 %v1234, %v1462
        %v1527 = vadd.f32 %v1235, %v1463
        %v1528 = vadd.f32 %v1236, %v1464
        %v1529 = vadd.f32 %v1237, %v1465
        %v1530 = vadd.f32 %v1238, %v1466
        %v1531 = vadd.f32 %v1239, %v1467
        %v1532 = vadd.f32 %v1240, %v1468
        %v1533 = vadd.f32 %v1241, %v1469
        %v1534 = vadd.f32 %v1242, %v1470
        %v1535 = vadd.f32 %v1243, %v1471
        %v1536 = vadd.f32 %v1244, %v1472
        %v1537 = vmax.f32 %v1473, 0.0
        %v1538 = vmax.f32 %v1474, 0.0
        %v1539 = vmax.f32 %v1475, 0.0
        %v1540 = vmax.f32 %v1476, 0.0
        %v1541 = vmax.f32 %v1477, 0.0
        %v1542 = vmax.f32 %v1478, 0.0
        %v1543 = vmax.f32 %v1479, 0.0
        %v1544 = vmax.f32 %v1480, 0.0
        %v1545 = vmax.f32 %v1481, 0.0
        %v1546 = vmax.f32 %v1482, 0.0
        %v1547 = vmax.f32 %v1483, 0.0
        %v1548 = vmax.f32 %v1484, 0.0
        %v1549 = vmax.f32 %v1485, 0.0
        %v1550 = vmax.f32 %v1486, 0.0
        %v1551 = vmax.f32 %v1487, 0.0
        %v1552 = vmax.f32 %v1488, 0.0
        %v1553 = vmax.f32 %v1489, 0.0
        %v1554 = vmax.f32 %v1490, 0.0
        %v1555 = vmax.f32 %v1491, 0.0
        %v1556 = vmax.f32 %v1492, 0.0
        %v1557 = vmax.f32 %v1493, 0.0
        %v1558 = vmax.f32 %v1494, 0.0
        %v1559 = vmax.f32 %v1495, 0.0
        %v1560 = vmax.f32 %v1496, 0.0
        %v1561 = vmax.f32 %v1497, 0.0
        %v1562 = vmax.f32 %v1498, 0.0
        %v1563 = vmax.f32 %v1499, 0.0
        %v1564 = vmax.f32 %v1500, 0.0
        %v1565 = vmax.f32 %v1501, 0.0
        %v1566 = vmax.f32 %v1502, 0.0
        %v1567 = vmax.f32 %v1503, 0.0
        %v1568 = vmax.f32 %v1504, 0.0
        %v1569 = vmax.f32 %v1505, 0.0
        %v1570 = vmax.f32 %v1506, 0.0
        %v1571 = vmax.f32 %v1507, 0.0
        %v1572 = vmax.f32 %v1508, 0.0
        %v1573 = vmax.f32 %v1509, 0.0
        %v1574 = vmax.f32 %v1510, 0.0
        %v1575 = vmax.f32 %v1511, 0.0
        %v1576 = vmax.f32 %v1512, 0.0
        %v1577 = vmax.f32 %v1513, 0.0
        %v1578 = vmax.f32 %v1514, 0.0
        %v1579 = vmax.f32 %v1515, 0.0
        %v1580 = vmax.f32 %v1516, 0.0
        %v1581 = vmax.f32 %v1517, 0.0
        %v1582 = vmax.f32 %v1518, 0.0
        %v1583 = vmax.f32 %v1519, 0.0
        %v1584 = vmax.f32 %v1520, 0.0
        %v1585 = vmax.f32 %v1521, 0.0
        %v1586 = vmax.f32 %v1522, 0.0
        %v1587 = vmax.f32 %v1523, 0.0
        %v1588 = vmax.f32 %v1524, 0.0
        %v1589 = vmax.f32 %v1525, 0.0
        %v1590 = vmax.f32 %v1526, 0.0
        %v1591 = vmax.f32 %v1527, 0.0
        %v1592 = vmax.f32 %v1528, 0.0
        %v1593 = vmax.f32 %v1529, 0.0
        %v1594 = vmax.f32 %v1530, 0.0
        %v1595 = vmax.f32 %v1531, 0.0
        %v1596 = vmax.f32 %v1532, 0.0
        %v1597 = vmax.f32 %v1533, 0.0
        %v1598 = vmax.f32 %v1534, 0.0
        %v1599 = vmax.f32 %v1535, 0.0
        %v1600 = vmax.f32 %v1536, 0.0
        %v1601 = vpack.c.bf16 %v1539, %v1537
        %v1602 = vpack.c.bf16 %v1540, %v1538
        %v1603 = vpack.c.bf16 %v1543, %v1541
        %v1604 = vpack.c.bf16 %v1544, %v1542
        %v1605 = vpack.c.bf16 %v1547, %v1545
        %v1606 = vpack.c.bf16 %v1548, %v1546
        %v1607 = vpack.c.bf16 %v1551, %v1549
        %v1608 = vpack.c.bf16 %v1552, %v1550
        %v1609 = vpack.c.bf16 %v1555, %v1553
        %v1610 = vpack.c.bf16 %v1556, %v1554
        %v1611 = vpack.c.bf16 %v1559, %v1557
        %v1612 = vpack.c.bf16 %v1560, %v1558
        %v1613 = vpack.c.bf16 %v1563, %v1561
        %v1614 = vpack.c.bf16 %v1564, %v1562
        %v1615 = vpack.c.bf16 %v1567, %v1565
        %v1616 = vpack.c.bf16 %v1568, %v1566
        %v1617 = vpack.c.bf16 %v1571, %v1569
        %v1618 = vpack.c.bf16 %v1572, %v1570
        %v1619 = vpack.c.bf16 %v1575, %v1573
        %v1620 = vpack.c.bf16 %v1576, %v1574
        %v1621 = vpack.c.bf16 %v1579, %v1577
        %v1622 = vpack.c.bf16 %v1580, %v1578
        %v1623 = vpack.c.bf16 %v1583, %v1581
        %v1624 = vpack.c.bf16 %v1584, %v1582
        %v1625 = vpack.c.bf16 %v1587, %v1585
        %v1626 = vpack.c.bf16 %v1588, %v1586
        %v1627 = vpack.c.bf16 %v1591, %v1589
        %v1628 = vpack.c.bf16 %v1592, %v1590
        %v1629 = vpack.c.bf16 %v1595, %v1593
        %v1630 = vpack.c.bf16 %v1596, %v1594
        %v1631 = vpack.c.bf16 %v1599, %v1597
        %v1632 = vpack.c.bf16 %v1600, %v1598
        %v1633 = vld [vmem:[%s2] sm:$0xf]
        %v1634 = vld [vmem:[%s2 + $0x4] sm:$0xf]
        %v1635 = vld [vmem:[%s2 + $0x8] sm:$0xf]
        %v1636 = vld [vmem:[%s2 + $0xc] sm:$0xf]
        %v1637 = vld [vmem:[%s2 + $0x10] sm:$0xf]
        %v1638 = vld [vmem:[%s2 + $0x14] sm:$0xf]
        %v1639 = vld [vmem:[%s2 + $0x18] sm:$0xf]
        %v1640 = vld [vmem:[%s2 + $0x1c] sm:$0xf]
        %v1641 = vld [vmem:[%s2 + $0x20] sm:$0xf]
        %v1642 = vld [vmem:[%s2 + $0x24] sm:$0xf]
        %v1643 = vld [vmem:[%s2 + $0x28] sm:$0xf]
        %v1644 = vld [vmem:[%s2 + $0x2c] sm:$0xf]
        %v1645 = vld [vmem:[%s2 + $0x30] sm:$0xf]
        %v1646 = vld [vmem:[%s2 + $0x34] sm:$0xf]
        %v1647 = vld [vmem:[%s2 + $0x38] sm:$0xf]
        %v1648 = vld [vmem:[%s2 + $0x3c] sm:$0xf]
        %v1649 = vld [vmem:[%s2 + $0x40] sm:$0xf]
        %v1650 = vld [vmem:[%s2 + $0x44] sm:$0xf]
        %v1651 = vld [vmem:[%s2 + $0x48] sm:$0xf]
        %v1652 = vld [vmem:[%s2 + $0x4c] sm:$0xf]
        %v1653 = vld [vmem:[%s2 + $0x50] sm:$0xf]
        %v1654 = vld [vmem:[%s2 + $0x54] sm:$0xf]
        %v1655 = vld [vmem:[%s2 + $0x58] sm:$0xf]
        %v1656 = vld [vmem:[%s2 + $0x5c] sm:$0xf]
        %v1657 = vld [vmem:[%s2 + $0x60] sm:$0xf]
        %v1658 = vld [vmem:[%s2 + $0x64] sm:$0xf]
        %v1659 = vld [vmem:[%s2 + $0x68] sm:$0xf]
        %v1660 = vld [vmem:[%s2 + $0x6c] sm:$0xf]
        %v1661 = vld [vmem:[%s2 + $0x70] sm:$0xf]
        %v1662 = vld [vmem:[%s2 + $0x74] sm:$0xf]
        %v1663 = vld [vmem:[%s2 + $0x78] sm:$0xf]
        %v1664 = vld [vmem:[%s2 + $0x7c] sm:$0xf]
        %v1697 = vunpack.c.l.b16 %v1633
        %v1698 = vunpack.c.l.b16 %v1634
        %v1699 = vunpack.c.l.b16 %v1635
        %v1700 = vunpack.c.l.b16 %v1636
        %v1701 = vunpack.c.l.b16 %v1637
        %v1702 = vunpack.c.l.b16 %v1638
        %v1703 = vunpack.c.l.b16 %v1639
        %v1704 = vunpack.c.l.b16 %v1640
        %v1705 = vunpack.c.l.b16 %v1641
        %v1706 = vunpack.c.l.b16 %v1642
        %v1707 = vunpack.c.l.b16 %v1643
        %v1708 = vunpack.c.l.b16 %v1644
        %v1709 = vunpack.c.l.b16 %v1645
        %v1710 = vunpack.c.l.b16 %v1646
        %v1711 = vunpack.c.l.b16 %v1647
        %v1712 = vunpack.c.l.b16 %v1648
        %v1713 = vunpack.c.l.b16 %v1649
        %v1714 = vunpack.c.l.b16 %v1650
        %v1715 = vunpack.c.l.b16 %v1651
        %v1716 = vunpack.c.l.b16 %v1652
        %v1717 = vunpack.c.l.b16 %v1653
        %v1718 = vunpack.c.l.b16 %v1654
        %v1719 = vunpack.c.l.b16 %v1655
        %v1720 = vunpack.c.l.b16 %v1656
        %v1721 = vunpack.c.l.b16 %v1657
        %v1722 = vunpack.c.l.b16 %v1658
        %v1723 = vunpack.c.l.b16 %v1659
        %v1724 = vunpack.c.l.b16 %v1660
        %v1725 = vunpack.c.l.b16 %v1661
        %v1726 = vunpack.c.l.b16 %v1662
        %v1727 = vunpack.c.l.b16 %v1663
        %v1728 = vunpack.c.l.b16 %v1664
        %v1729 = vpack.c.b16 %v1698, %v1697
        %v1730 = vpack.c.b16 %v1700, %v1699
        %v1731 = vpack.c.b16 %v1702, %v1701
        %v1732 = vpack.c.b16 %v1704, %v1703
        %v1733 = vpack.c.b16 %v1706, %v1705
        %v1734 = vpack.c.b16 %v1708, %v1707
        %v1735 = vpack.c.b16 %v1710, %v1709
        %v1736 = vpack.c.b16 %v1712, %v1711
        %v1737 = vpack.c.b16 %v1714, %v1713
        %v1738 = vpack.c.b16 %v1716, %v1715
        %v1739 = vpack.c.b16 %v1718, %v1717
        %v1740 = vpack.c.b16 %v1720, %v1719
        %v1741 = vpack.c.b16 %v1722, %v1721
        %v1742 = vpack.c.b16 %v1724, %v1723
        %v1743 = vpack.c.b16 %v1726, %v1725
        %v1744 = vpack.c.b16 %v1728, %v1727
        %1761 = vmatprep.subr.bf16.mxu0 0
        %1762 = vmatpush1.bf16.msra.mxu0 %v1729
        %1763 = vmatprep.subr.bf16.mxu0 0
        %1764 = vmatpush1.bf16.msra.mxu0 %v1730
        %1765 = vmatprep.subr.bf16.mxu0 0
        %1766 = vmatpush1.bf16.msra.mxu0 %v1731
        %1767 = vmatprep.subr.bf16.mxu0 0
        %1768 = vmatpush1.bf16.msra.mxu0 %v1732
        %1769 = vmatprep.subr.bf16.mxu0 0
        %1770 = vmatpush1.bf16.msra.mxu0 %v1733
        %1771 = vmatprep.subr.bf16.mxu0 0
        %1772 = vmatpush1.bf16.msra.mxu0 %v1734
        %1773 = vmatprep.subr.bf16.mxu0 0
        %1774 = vmatpush1.bf16.msra.mxu0 %v1735
        %1775 = vmatprep.subr.bf16.mxu0 0
        %1776 = vmatpush1.bf16.msra.mxu0 %v1736
        %1777 = vmatprep.subr.bf16.mxu0 0
        %1778 = vmatpush1.bf16.msra.mxu0 %v1737
        %1779 = vmatprep.subr.bf16.mxu0 0
        %1780 = vmatpush1.bf16.msra.mxu0 %v1738
        %1781 = vmatprep.subr.bf16.mxu0 0
        %1782 = vmatpush1.bf16.msra.mxu0 %v1739
        %1783 = vmatprep.subr.bf16.mxu0 0
        %1784 = vmatpush1.bf16.msra.mxu0 %v1740
        %1785 = vmatprep.subr.bf16.mxu0 0
        %1786 = vmatpush1.bf16.msra.mxu0 %v1741
        %1787 = vmatprep.subr.bf16.mxu0 0
        %1788 = vmatpush1.bf16.msra.mxu0 %v1742
        %1789 = vmatprep.subr.bf16.mxu0 0
        %1790 = vmatpush1.bf16.msra.mxu0 %v1743
        %1791 = vmatprep.subr.bf16.mxu0 0
        %1792 = vmatpush1.bf16.msra.mxu0 %v1744
        %1793 = vmatprep.mubr.bf16.mxu0 %v1602
        %1794 = vmatmul.mubr.bf16.gmra.mrb[0].mxu0 %v1601
        %v1795 = vpop.f32.mrb[0].mxu0
        %v1796 = vadd.f32 0.0, %v1795
        %v1797 = vpop.f32.mrb[0].mxu0
        %v1798 = vpop.f32.mrb[0].mxu0
        %v1799 = vadd.f32 0.0, %v1798
        %v1800 = vpop.f32.mrb[0].mxu0
        %1801 = vmatprep.mubr.bf16.mxu0 %v1604
        %1802 = vmatmul.mubr.bf16.gmra.mrb[0].mxu0 %v1603
        %v1803 = vpop.f32.mrb[0].mxu0
        %v1804 = vadd.f32 0.0, %v1803
        %v1805 = vpop.f32.mrb[0].mxu0
        %v1806 = vpop.f32.mrb[0].mxu0
        %v1807 = vadd.f32 0.0, %v1806
        %v1808 = vpop.f32.mrb[0].mxu0
        %1809 = vmatprep.mubr.bf16.mxu0 %v1606
        %1810 = vmatmul.mubr.bf16.gmra.mrb[0].mxu0 %v1605
        %v1811 = vpop.f32.mrb[0].mxu0
        %v1812 = vadd.f32 0.0, %v1811
        %v1813 = vpop.f32.mrb[0].mxu0
        %v1814 = vpop.f32.mrb[0].mxu0
        %v1815 = vadd.f32 0.0, %v1814
        %v1816 = vpop.f32.mrb[0].mxu0
        %1817 = vmatprep.mubr.bf16.mxu0 %v1608
        %1818 = vmatmul.mubr.bf16.gmra.mrb[0].mxu0 %v1607
        %v1819 = vpop.f32.mrb[0].mxu0
        %v1820 = vadd.f32 0.0, %v1819
        %v1821 = vpop.f32.mrb[0].mxu0
        %v1822 = vpop.f32.mrb[0].mxu0
        %v1823 = vadd.f32 0.0, %v1822
        %v1824 = vpop.f32.mrb[0].mxu0
        %1825 = vmatprep.mubr.bf16.mxu0 %v1610
        %1826 = vmatmul.mubr.bf16.gmra.mrb[0].mxu0 %v1609
        %v1827 = vpop.f32.mrb[0].mxu0
        %v1828 = vadd.f32 0.0, %v1827
        %v1829 = vpop.f32.mrb[0].mxu0
        %v1830 = vpop.f32.mrb[0].mxu0
        %v1831 = vadd.f32 0.0, %v1830
        %v1832 = vpop.f32.mrb[0].mxu0
        %1833 = vmatprep.mubr.bf16.mxu0 %v1612
        %1834 = vmatmul.mubr.bf16.gmra.mrb[0].mxu0 %v1611
        %v1835 = vpop.f32.mrb[0].mxu0
        %v1836 = vadd.f32 0.0, %v1835
        %v1837 = vpop.f32.mrb[0].mxu0
        %v1838 = vpop.f32.mrb[0].mxu0
        %v1839 = vadd.f32 0.0, %v1838
        %v1840 = vpop.f32.mrb[0].mxu0
        %1841 = vmatprep.mubr.bf16.mxu0 %v1614
        %1842 = vmatmul.mubr.bf16.gmra.mrb[0].mxu0 %v1613
        %v1843 = vpop.f32.mrb[0].mxu0
        %v1844 = vadd.f32 0.0, %v1843
        %v1845 = vpop.f32.mrb[0].mxu0
        %v1846 = vpop.f32.mrb[0].mxu0
        %v1847 = vadd.f32 0.0, %v1846
        %v1848 = vpop.f32.mrb[0].mxu0
        %1849 = vmatprep.mubr.bf16.mxu0 %v1616
        %1850 = vmatmul.mubr.bf16.gmra.mrb[0].mxu0 %v1615
        %v1851 = vpop.f32.mrb[0].mxu0
        %v1852 = vadd.f32 0.0, %v1851
        %v1853 = vpop.f32.mrb[0].mxu0
        %v1854 = vpop.f32.mrb[0].mxu0
        %v1855 = vadd.f32 0.0, %v1854
        %v1856 = vpop.f32.mrb[0].mxu0
        %1857 = vmatprep.mubr.bf16.mxu0 %v1618
        %1858 = vmatmul.mubr.bf16.gmra.mrb[0].mxu0 %v1617
        %v1859 = vpop.f32.mrb[0].mxu0
        %v1860 = vadd.f32 0.0, %v1859
        %v1861 = vpop.f32.mrb[0].mxu0
        %v1862 = vpop.f32.mrb[0].mxu0
        %v1863 = vadd.f32 0.0, %v1862
        %v1864 = vpop.f32.mrb[0].mxu0
        %1865 = vmatprep.mubr.bf16.mxu0 %v1620
        %1866 = vmatmul.mubr.bf16.gmra.mrb[0].mxu0 %v1619
        %v1867 = vpop.f32.mrb[0].mxu0
        %v1868 = vadd.f32 0.0, %v1867
        %v1869 = vpop.f32.mrb[0].mxu0
        %v1870 = vpop.f32.mrb[0].mxu0
        %v1871 = vadd.f32 0.0, %v1870
        %v1872 = vpop.f32.mrb[0].mxu0
        %1873 = vmatprep.mubr.bf16.mxu0 %v1622
        %1874 = vmatmul.mubr.bf16.gmra.mrb[0].mxu0 %v1621
        %v1875 = vpop.f32.mrb[0].mxu0
        %v1876 = vadd.f32 0.0, %v1875
        %v1877 = vpop.f32.mrb[0].mxu0
        %v1878 = vpop.f32.mrb[0].mxu0
        %v1879 = vadd.f32 0.0, %v1878
        %v1880 = vpop.f32.mrb[0].mxu0
        %1881 = vmatprep.mubr.bf16.mxu0 %v1624
        %1882 = vmatmul.mubr.bf16.gmra.mrb[0].mxu0 %v1623
        %v1883 = vpop.f32.mrb[0].mxu0
        %v1884 = vadd.f32 0.0, %v1883
        %v1885 = vpop.f32.mrb[0].mxu0
        %v1886 = vpop.f32.mrb[0].mxu0
        %v1887 = vadd.f32 0.0, %v1886
        %v1888 = vpop.f32.mrb[0].mxu0
        %1889 = vmatprep.mubr.bf16.mxu0 %v1626
        %1890 = vmatmul.mubr.bf16.gmra.mrb[0].mxu0 %v1625
        %v1891 = vpop.f32.mrb[0].mxu0
        %v1892 = vadd.f32 0.0, %v1891
        %v1893 = vpop.f32.mrb[0].mxu0
        %v1894 = vpop.f32.mrb[0].mxu0
        %v1895 = vadd.f32 0.0, %v1894
        %v1896 = vpop.f32.mrb[0].mxu0
        %1897 = vmatprep.mubr.bf16.mxu0 %v1628
        %1898 = vmatmul.mubr.bf16.gmra.mrb[0].mxu0 %v1627
        %v1899 = vpop.f32.mrb[0].mxu0
        %v1900 = vadd.f32 0.0, %v1899
        %v1901 = vpop.f32.mrb[0].mxu0
        %v1902 = vpop.f32.mrb[0].mxu0
        %v1903 = vadd.f32 0.0, %v1902
        %v1904 = vpop.f32.mrb[0].mxu0
        %1905 = vmatprep.mubr.bf16.mxu0 %v1630
        %1906 = vmatmul.mubr.bf16.gmra.mrb[0].mxu0 %v1629
        %v1907 = vpop.f32.mrb[0].mxu0
        %v1908 = vadd.f32 0.0, %v1907
        %v1909 = vpop.f32.mrb[0].mxu0
        %v1910 = vpop.f32.mrb[0].mxu0
        %v1911 = vadd.f32 0.0, %v1910
        %v1912 = vpop.f32.mrb[0].mxu0
        %1913 = vmatprep.mubr.bf16.mxu0 %v1632
        %1914 = vmatmul.mubr.bf16.gmra.mrb[0].mxu0 %v1631
        %v1915 = vpop.f32.mrb[0].mxu0
        %v1916 = vadd.f32 0.0, %v1915
        %v1917 = vpop.f32.mrb[0].mxu0
        %v1918 = vpop.f32.mrb[0].mxu0
        %v1919 = vadd.f32 0.0, %v1918
        %v1920 = vpop.f32.mrb[0].mxu0
        %1921 = vdwg.mxu0
        %1922 = vmin.xlane.f32.xlu0 %v1796
        %v1923 = vpop.xlane.xlu0 %1922
        %1924 = vmin.xlane.f32.xlu0 %v1799
        %v1925 = vpop.xlane.xlu0 %1924
        %1926 = vmin.xlane.f32.xlu0 %v1804
        %v1927 = vpop.xlane.xlu0 %1926
        %1928 = vmin.xlane.f32.xlu0 %v1807
        %v1929 = vpop.xlane.xlu0 %1928
        %1930 = vmin.xlane.f32.xlu0 %v1812
        %v1931 = vpop.xlane.xlu0 %1930
        %1932 = vmin.xlane.f32.xlu0 %v1815
        %v1933 = vpop.xlane.xlu0 %1932
        %1934 = vmin.xlane.f32.xlu0 %v1820
        %v1935 = vpop.xlane.xlu0 %1934
        %1936 = vmin.xlane.f32.xlu0 %v1823
        %v1937 = vpop.xlane.xlu0 %1936
        %1938 = vmin.xlane.f32.xlu0 %v1828
        %v1939 = vpop.xlane.xlu0 %1938
        %1940 = vmin.xlane.f32.xlu0 %v1831
        %v1941 = vpop.xlane.xlu0 %1940
        %1942 = vmin.xlane.f32.xlu0 %v1836
        %v1943 = vpop.xlane.xlu0 %1942
        %1944 = vmin.xlane.f32.xlu0 %v1839
        %v1945 = vpop.xlane.xlu0 %1944
        %1946 = vmin.xlane.f32.xlu0 %v1844
        %v1947 = vpop.xlane.xlu0 %1946
        %1948 = vmin.xlane.f32.xlu0 %v1847
        %v1949 = vpop.xlane.xlu0 %1948
        %1950 = vmin.xlane.f32.xlu0 %v1852
        %v1951 = vpop.xlane.xlu0 %1950
        %1952 = vmin.xlane.f32.xlu0 %v1855
        %v1953 = vpop.xlane.xlu0 %1952
        %1954 = vmin.xlane.f32.xlu0 %v1860
        %v1955 = vpop.xlane.xlu0 %1954
        %1956 = vmin.xlane.f32.xlu0 %v1863
        %v1957 = vpop.xlane.xlu0 %1956
        %1958 = vmin.xlane.f32.xlu0 %v1868
        %v1959 = vpop.xlane.xlu0 %1958
        %1960 = vmin.xlane.f32.xlu0 %v1871
        %v1961 = vpop.xlane.xlu0 %1960
        %1962 = vmin.xlane.f32.xlu0 %v1876
        %v1963 = vpop.xlane.xlu0 %1962
        %1964 = vmin.xlane.f32.xlu0 %v1879
        %v1965 = vpop.xlane.xlu0 %1964
        %1966 = vmin.xlane.f32.xlu0 %v1884
        %v1967 = vpop.xlane.xlu0 %1966
        %1968 = vmin.xlane.f32.xlu0 %v1887
        %v1969 = vpop.xlane.xlu0 %1968
        %1970 = vmin.xlane.f32.xlu0 %v1892
        %v1971 = vpop.xlane.xlu0 %1970
        %1972 = vmin.xlane.f32.xlu0 %v1895
        %v1973 = vpop.xlane.xlu0 %1972
        %1974 = vmin.xlane.f32.xlu0 %v1900
        %v1975 = vpop.xlane.xlu0 %1974
        %1976 = vmin.xlane.f32.xlu0 %v1903
        %v1977 = vpop.xlane.xlu0 %1976
        %1978 = vmin.xlane.f32.xlu0 %v1908
        %v1979 = vpop.xlane.xlu0 %1978
        %1980 = vmin.xlane.f32.xlu0 %v1911
        %v1981 = vpop.xlane.xlu0 %1980
        %1982 = vmin.xlane.f32.xlu0 %v1916
        %v1983 = vpop.xlane.xlu0 %1982
        %1984 = vmin.xlane.f32.xlu0 %v1919
        %v1985 = vpop.xlane.xlu0 %1984
        %v2018 = vlaneseq
        %v2019 = vand.u32 %v2018, 127
        %v2020 = vlaneseq
        %v2021 = vshrl.u32 %v2020, 7
        %v2022 = vsub.s32 %v2019, %v2021
        %v2023 = vrot.slane %v1923, %v2022
        %v2024 = vadd.s32 %v2019, 4294967288
        %v2025 = vlaneseq
        %v2026 = vshrl.u32 %v2025, 7
        %v2027 = vsub.s32 %v2024, %v2026
        %v2028 = vrot.slane %v1925, %v2027
        %vm2029 = vcmask 130112
        %v2030 = vsel %vm2029, %v2028, %v2023
        %v2031 = vadd.s32 %v2019, 4294967280
        %v2032 = vlaneseq
        %v2033 = vshrl.u32 %v2032, 7
        %v2034 = vsub.s32 %v2031, %v2033
        %v2035 = vrot.slane %v1927, %v2034
        %vm2036 = vcmask 195712
        %v2037 = vsel %vm2036, %v2035, %v2030
        %v2038 = vadd.s32 %v2019, 4294967272
        %v2039 = vlaneseq
        %v2040 = vshrl.u32 %v2039, 7
        %v2041 = vsub.s32 %v2038, %v2040
        %v2042 = vrot.slane %v1929, %v2041
        %vm2043 = vcmask 261312
        %v2044 = vsel %vm2043, %v2042, %v2037
        %v2045 = vadd.s32 %v2019, 4294967264
        %v2046 = vlaneseq
        %v2047 = vshrl.u32 %v2046, 7
        %v2048 = vsub.s32 %v2045, %v2047
        %v2049 = vrot.slane %v1931, %v2048
        %vm2050 = vcmask 326912
        %v2051 = vsel %vm2050, %v2049, %v2044
        %v2052 = vadd.s32 %v2019, 4294967256
        %v2053 = vlaneseq
        %v2054 = vshrl.u32 %v2053, 7
        %v2055 = vsub.s32 %v2052, %v2054
        %v2056 = vrot.slane %v1933, %v2055
        %vm2057 = vcmask 392512
        %v2058 = vsel %vm2057, %v2056, %v2051
        %v2059 = vadd.s32 %v2019, 4294967248
        %v2060 = vlaneseq
        %v2061 = vshrl.u32 %v2060, 7
        %v2062 = vsub.s32 %v2059, %v2061
        %v2063 = vrot.slane %v1935, %v2062
        %vm2064 = vcmask 458112
        %v2065 = vsel %vm2064, %v2063, %v2058
        %v2066 = vadd.s32 %v2019, 4294967240
        %v2067 = vlaneseq
        %v2068 = vshrl.u32 %v2067, 7
        %v2069 = vsub.s32 %v2066, %v2068
        %v2070 = vrot.slane %v1937, %v2069
        %vm2071 = vcmask 523712
        %v2072 = vsel %vm2071, %v2070, %v2065
        %v2073 = vadd.s32 %v2019, 4294967232
        %v2074 = vlaneseq
        %v2075 = vshrl.u32 %v2074, 7
        %v2076 = vsub.s32 %v2073, %v2075
        %v2077 = vrot.slane %v1939, %v2076
        %vm2078 = vcmask 589312
        %v2079 = vsel %vm2078, %v2077, %v2072
        %v2080 = vadd.s32 %v2019, 4294967224
        %v2081 = vlaneseq
        %v2082 = vshrl.u32 %v2081, 7
        %v2083 = vsub.s32 %v2080, %v2082
        %v2084 = vrot.slane %v1941, %v2083
        %vm2085 = vcmask 654912
        %v2086 = vsel %vm2085, %v2084, %v2079
        %v2087 = vadd.s32 %v2019, 4294967216
        %v2088 = vlaneseq
        %v2089 = vshrl.u32 %v2088, 7
        %v2090 = vsub.s32 %v2087, %v2089
        %v2091 = vrot.slane %v1943, %v2090
        %vm2092 = vcmask 720512
        %v2093 = vsel %vm2092, %v2091, %v2086
        %v2094 = vadd.s32 %v2019, 4294967208
        %v2095 = vlaneseq
        %v2096 = vshrl.u32 %v2095, 7
        %v2097 = vsub.s32 %v2094, %v2096
        %v2098 = vrot.slane %v1945, %v2097
        %vm2099 = vcmask 786112
        %v2100 = vsel %vm2099, %v2098, %v2093
        %v2101 = vadd.s32 %v2019, 4294967200
        %v2102 = vlaneseq
        %v2103 = vshrl.u32 %v2102, 7
        %v2104 = vsub.s32 %v2101, %v2103
        %v2105 = vrot.slane %v1947, %v2104
        %vm2106 = vcmask 851712
        %v2107 = vsel %vm2106, %v2105, %v2100
        %v2108 = vadd.s32 %v2019, 4294967192
        %v2109 = vlaneseq
        %v2110 = vshrl.u32 %v2109, 7
        %v2111 = vsub.s32 %v2108, %v2110
        %v2112 = vrot.slane %v1949, %v2111
        %vm2113 = vcmask 917312
        %v2114 = vsel %vm2113, %v2112, %v2107
        %v2115 = vadd.s32 %v2019, 4294967184
        %v2116 = vlaneseq
        %v2117 = vshrl.u32 %v2116, 7
        %v2118 = vsub.s32 %v2115, %v2117
        %v2119 = vrot.slane %v1951, %v2118
        %vm2120 = vcmask 982912
        %v2121 = vsel %vm2120, %v2119, %v2114
        %v2122 = vadd.s32 %v2019, 4294967176
        %v2123 = vlaneseq
        %v2124 = vshrl.u32 %v2123, 7
        %v2125 = vsub.s32 %v2122, %v2124
        %v2126 = vrot.slane %v1953, %v2125
        %vm2127 = vcmask 1048512
        %v2128 = vsel %vm2127, %v2126, %v2121
        %v2129 = vlaneseq
        %v2130 = vshrl.u32 %v2129, 7
        %v2131 = vsub.s32 %v2019, %v2130
        %v2132 = vrot.slane %v1955, %v2131
        %v2133 = vlaneseq
        %v2134 = vshrl.u32 %v2133, 7
        %v2135 = vsub.s32 %v2024, %v2134
        %v2136 = vrot.slane %v1957, %v2135
        %v2137 = vsel %vm2029, %v2136, %v2132
        %v2138 = vlaneseq
        %v2139 = vshrl.u32 %v2138, 7
        %v2140 = vsub.s32 %v2031, %v2139
        %v2141 = vrot.slane %v1959, %v2140
        %v2142 = vsel %vm2036, %v2141, %v2137
        %v2143 = vlaneseq
        %v2144 = vshrl.u32 %v2143, 7
        %v2145 = vsub.s32 %v2038, %v2144
        %v2146 = vrot.slane %v1961, %v2145
        %v2147 = vsel %vm2043, %v2146, %v2142
        %v2148 = vlaneseq
        %v2149 = vshrl.u32 %v2148, 7
        %v2150 = vsub.s32 %v2045, %v2149
        %v2151 = vrot.slane %v1963, %v2150
        %v2152 = vsel %vm2050, %v2151, %v2147
        %v2153 = vlaneseq
        %v2154 = vshrl.u32 %v2153, 7
        %v2155 = vsub.s32 %v2052, %v2154
        %v2156 = vrot.slane %v1965, %v2155
        %v2157 = vsel %vm2057, %v2156, %v2152
        %v2158 = vlaneseq
        %v2159 = vshrl.u32 %v2158, 7
        %v2160 = vsub.s32 %v2059, %v2159
        %v2161 = vrot.slane %v1967, %v2160
        %v2162 = vsel %vm2064, %v2161, %v2157
        %v2163 = vlaneseq
        %v2164 = vshrl.u32 %v2163, 7
        %v2165 = vsub.s32 %v2066, %v2164
        %v2166 = vrot.slane %v1969, %v2165
        %v2167 = vsel %vm2071, %v2166, %v2162
        %v2168 = vlaneseq
        %v2169 = vshrl.u32 %v2168, 7
        %v2170 = vsub.s32 %v2073, %v2169
        %v2171 = vrot.slane %v1971, %v2170
        %v2172 = vsel %vm2078, %v2171, %v2167
        %v2173 = vlaneseq
        %v2174 = vshrl.u32 %v2173, 7
        %v2175 = vsub.s32 %v2080, %v2174
        %v2176 = vrot.slane %v1973, %v2175
        %v2177 = vsel %vm2085, %v2176, %v2172
        %v2178 = vlaneseq
        %v2179 = vshrl.u32 %v2178, 7
        %v2180 = vsub.s32 %v2087, %v2179
        %v2181 = vrot.slane %v1975, %v2180
        %v2182 = vsel %vm2092, %v2181, %v2177
        %v2183 = vlaneseq
        %v2184 = vshrl.u32 %v2183, 7
        %v2185 = vsub.s32 %v2094, %v2184
        %v2186 = vrot.slane %v1977, %v2185
        %v2187 = vsel %vm2099, %v2186, %v2182
        %v2188 = vlaneseq
        %v2189 = vshrl.u32 %v2188, 7
        %v2190 = vsub.s32 %v2101, %v2189
        %v2191 = vrot.slane %v1979, %v2190
        %v2192 = vsel %vm2106, %v2191, %v2187
        %v2193 = vlaneseq
        %v2194 = vshrl.u32 %v2193, 7
        %v2195 = vsub.s32 %v2108, %v2194
        %v2196 = vrot.slane %v1981, %v2195
        %v2197 = vsel %vm2113, %v2196, %v2192
        %v2198 = vlaneseq
        %v2199 = vshrl.u32 %v2198, 7
        %v2200 = vsub.s32 %v2115, %v2199
        %v2201 = vrot.slane %v1983, %v2200
        %v2202 = vsel %vm2120, %v2201, %v2197
        %v2203 = vlaneseq
        %v2204 = vshrl.u32 %v2203, 7
        %v2205 = vsub.s32 %v2122, %v2204
        %v2206 = vrot.slane %v1985, %v2205
        %v2207 = vsel %vm2127, %v2206, %v2202
        %vm2208 = vcmask 1041409
        %v2209 = vsel %vm2208, %v2207, %v2128
        %2211 = vst [vmem:[%s361] sm:$0x3] %v2209
        %vm2212 = vcmask 523264
        %2213 = vst.msk [vmem:[%s354] sm:$0xff] %vm2212, %v1796
        %2214 = vst.msk [vmem:[%s354 + $0x8] sm:$0xff] %vm2212, %v1799
        %2215 = vst.msk [vmem:[%s354 + $0x10] sm:$0xff] %vm2212, %v1804
        %2216 = vst.msk [vmem:[%s354 + $0x18] sm:$0xff] %vm2212, %v1807
        %2217 = vst.msk [vmem:[%s354 + $0x20] sm:$0xff] %vm2212, %v1812
        %2218 = vst.msk [vmem:[%s354 + $0x28] sm:$0xff] %vm2212, %v1815
        %2219 = vst.msk [vmem:[%s354 + $0x30] sm:$0xff] %vm2212, %v1820
        %2220 = vst.msk [vmem:[%s354 + $0x38] sm:$0xff] %vm2212, %v1823
        %2221 = vst.msk [vmem:[%s354 + $0x40] sm:$0xff] %vm2212, %v1828
        %2222 = vst.msk [vmem:[%s354 + $0x48] sm:$0xff] %vm2212, %v1831
        %2223 = vst.msk [vmem:[%s354 + $0x50] sm:$0xff] %vm2212, %v1836
        %2224 = vst.msk [vmem:[%s354 + $0x58] sm:$0xff] %vm2212, %v1839
        %2225 = vst.msk [vmem:[%s354 + $0x60] sm:$0xff] %vm2212, %v1844
        %2226 = vst.msk [vmem:[%s354 + $0x68] sm:$0xff] %vm2212, %v1847
        %2227 = vst.msk [vmem:[%s354 + $0x70] sm:$0xff] %vm2212, %v1852
        %2228 = vst.msk [vmem:[%s354 + $0x78] sm:$0xff] %vm2212, %v1855
        %2229 = vst.msk [vmem:[%s354 + $0x80] sm:$0xff] %vm2212, %v1860
        %2230 = vst.msk [vmem:[%s354 + $0x88] sm:$0xff] %vm2212, %v1863
        %2231 = vst.msk [vmem:[%s354 + $0x90] sm:$0xff] %vm2212, %v1868
        %2232 = vst.msk [vmem:[%s354 + $0x98] sm:$0xff] %vm2212, %v1871
        %2233 = vst.msk [vmem:[%s354 + $0xa0] sm:$0xff] %vm2212, %v1876
        %2234 = vst.msk [vmem:[%s354 + $0xa8] sm:$0xff] %vm2212, %v1879
        %2235 = vst.msk [vmem:[%s354 + $0xb0] sm:$0xff] %vm2212, %v1884
        %2236 = vst.msk [vmem:[%s354 + $0xb8] sm:$0xff] %vm2212, %v1887
        %2237 = vst.msk [vmem:[%s354 + $0xc0] sm:$0xff] %vm2212, %v1892
        %2238 = vst.msk [vmem:[%s354 + $0xc8] sm:$0xff] %vm2212, %v1895
        %2239 = vst.msk [vmem:[%s354 + $0xd0] sm:$0xff] %vm2212, %v1900
        %2240 = vst.msk [vmem:[%s354 + $0xd8] sm:$0xff] %vm2212, %v1903
        %2241 = vst.msk [vmem:[%s354 + $0xe0] sm:$0xff] %vm2212, %v1908
        %2242 = vst.msk [vmem:[%s354 + $0xe8] sm:$0xff] %vm2212, %v1911
        %2243 = vst.msk [vmem:[%s354 + $0xf0] sm:$0xff] %vm2212, %v1916
        %2244 = vst.msk [vmem:[%s354 + $0xf8] sm:$0xff] %vm2212, %v1919
        %s2245 = sand.u32 %s95, 1
        %s2246 = sand.u32 %s95, 1
        %s2247 = smul.addr %s2246, 256
        %s2248 = scalar_lea.vmem [#allocation3], %s2247
        %s2249 = sand.u32 %s121, 1
        %s2250 = scalar_lea.sflag [#allocation5], %s2249
        %s2251 = sand.u32 %s121, 1
        %s2252 = smul.addr %s2251, 2
        %s2253 = scalar_lea.vmem [#allocation4], %s2252
        // Predicated region
        $region71: #{tpu_custom_call.1} parent=65 // pred_check
          %p2254 = pneg %p105
        $region72: #{tpu_custom_call.1} parent=65 // pred_check_branch
          %2256 = sbr.rel (%p2254) target = $region74
        $region73: #{tpu_custom_call.1} parent=65 // pred_region
          %s2257 = smul.u32 16, %s19
          %s2258 = smul.addr %s2257, 8
          %s2259 = scalar_lea.vmem %s3, %s2258
          // Predicated region
          $region75: #{tpu_custom_call.1} parent=73 // pred_check
            _
          $region76: #{tpu_custom_call.1} parent=73 // pred_check_branch
            %2261 = sbr.rel (0) target = $region78
          $region77: #{tpu_custom_call.1} parent=73 // pred_region
            // Predicated region
            $region79: #{tpu_custom_call.1} parent=77 // pred_check
              _
            $region80: #{tpu_custom_call.1} parent=77 // pred_check_branch
              %2263 = sbr.rel (0) target = $region82
            $region81: #{tpu_custom_call.1} parent=77 // pred_region
              // Predicated region
              $region94: #{tpu_custom_call.1} parent=81 // pred_check
                _
              $region95: #{tpu_custom_call.1} parent=81 // pred_check_branch
                %2340 = sbr.rel (0) target = $region97
              $region96: #{tpu_custom_call.1} parent=81 // pred_region
                loop: start=0, step=1, limit=1
                $region98: #{tpu_custom_call.1} parent=96 // loop_pre_header
                  _
                $region99: #{tpu_custom_call.1} parent=96 // loop_header
                  %s2342 = sphi 0, %s2346
                  %p2343 = scmp.ge.s32.totalorder %s2342, 1
                  %s2347 = sphi %s2248, %s2248
                  %s2348 = sphi %s2259, %s2259
                $region100: #{tpu_custom_call.1} parent=96 // loop_header_branch
                  %2345 = sbr.rel (%p2343) target = $region104
                $region101: #{tpu_custom_call.1} parent=96 // loop_body
                  %v2349 = vld [vmem:[%s2347] sm:$0xff]
                  %2350 = vst [vmem:[%s2348] sm:$0xff] %v2349
                  %v2351 = vld [vmem:[%s2347 + $0x8] sm:$0xff]
                  %2352 = vst [vmem:[%s2348 + $0x8] sm:$0xff] %v2351
                  %v2353 = vld [vmem:[%s2347 + $0x10] sm:$0xff]
                  %2354 = vst [vmem:[%s2348 + $0x10] sm:$0xff] %v2353
                  %v2355 = vld [vmem:[%s2347 + $0x18] sm:$0xff]
                  %2356 = vst [vmem:[%s2348 + $0x18] sm:$0xff] %v2355
                  %v2357 = vld [vmem:[%s2347 + $0x20] sm:$0xff]
                  %2358 = vst [vmem:[%s2348 + $0x20] sm:$0xff] %v2357
                  %v2359 = vld [vmem:[%s2347 + $0x28] sm:$0xff]
                  %2360 = vst [vmem:[%s2348 + $0x28] sm:$0xff] %v2359
                  %v2361 = vld [vmem:[%s2347 + $0x30] sm:$0xff]
                  %2362 = vst [vmem:[%s2348 + $0x30] sm:$0xff] %v2361
                  %v2363 = vld [vmem:[%s2347 + $0x38] sm:$0xff]
                  %2364 = vst [vmem:[%s2348 + $0x38] sm:$0xff] %v2363
                  %v2365 = vld [vmem:[%s2347 + $0x40] sm:$0xff]
                  %2366 = vst [vmem:[%s2348 + $0x40] sm:$0xff] %v2365
                  %v2367 = vld [vmem:[%s2347 + $0x48] sm:$0xff]
                  %2368 = vst [vmem:[%s2348 + $0x48] sm:$0xff] %v2367
                  %v2369 = vld [vmem:[%s2347 + $0x50] sm:$0xff]
                  %2370 = vst [vmem:[%s2348 + $0x50] sm:$0xff] %v2369
                  %v2371 = vld [vmem:[%s2347 + $0x58] sm:$0xff]
                  %2372 = vst [vmem:[%s2348 + $0x58] sm:$0xff] %v2371
                  %v2373 = vld [vmem:[%s2347 + $0x60] sm:$0xff]
                  %2374 = vst [vmem:[%s2348 + $0x60] sm:$0xff] %v2373
                  %v2375 = vld [vmem:[%s2347 + $0x68] sm:$0xff]
                  %2376 = vst [vmem:[%s2348 + $0x68] sm:$0xff] %v2375
                  %v2377 = vld [vmem:[%s2347 + $0x70] sm:$0xff]
                  %2378 = vst [vmem:[%s2348 + $0x70] sm:$0xff] %v2377
                  %v2379 = vld [vmem:[%s2347 + $0x78] sm:$0xff]
                  %2380 = vst [vmem:[%s2348 + $0x78] sm:$0xff] %v2379
                  %v2381 = vld [vmem:[%s2347 + $0x80] sm:$0xff]
                  %2382 = vst [vmem:[%s2348 + $0x100] sm:$0xff] %v2381
                  %v2383 = vld [vmem:[%s2347 + $0x88] sm:$0xff]
                  %2384 = vst [vmem:[%s2348 + $0x108] sm:$0xff] %v2383
                  %v2385 = vld [vmem:[%s2347 + $0x90] sm:$0xff]
                  %2386 = vst [vmem:[%s2348 + $0x110] sm:$0xff] %v2385
                  %v2387 = vld [vmem:[%s2347 + $0x98] sm:$0xff]
                  %2388 = vst [vmem:[%s2348 + $0x118] sm:$0xff] %v2387
                  %v2389 = vld [vmem:[%s2347 + $0xa0] sm:$0xff]
                  %2390 = vst [vmem:[%s2348 + $0x120] sm:$0xff] %v2389
                  %v2391 = vld [vmem:[%s2347 + $0xa8] sm:$0xff]
                  %2392 = vst [vmem:[%s2348 + $0x128] sm:$0xff] %v2391
                  %v2393 = vld [vmem:[%s2347 + $0xb0] sm:$0xff]
                  %2394 = vst [vmem:[%s2348 + $0x130] sm:$0xff] %v2393
                  %v2395 = vld [vmem:[%s2347 + $0xb8] sm:$0xff]
                  %2396 = vst [vmem:[%s2348 + $0x138] sm:$0xff] %v2395
                  %v2397 = vld [vmem:[%s2347 + $0xc0] sm:$0xff]
                  %2398 = vst [vmem:[%s2348 + $0x140] sm:$0xff] %v2397
                  %v2399 = vld [vmem:[%s2347 + $0xc8] sm:$0xff]
                  %2400 = vst [vmem:[%s2348 + $0x148] sm:$0xff] %v2399
                  %v2401 = vld [vmem:[%s2347 + $0xd0] sm:$0xff]
                  %2402 = vst [vmem:[%s2348 + $0x150] sm:$0xff] %v2401
                  %v2403 = vld [vmem:[%s2347 + $0xd8] sm:$0xff]
                  %2404 = vst [vmem:[%s2348 + $0x158] sm:$0xff] %v2403
                  %v2405 = vld [vmem:[%s2347 + $0xe0] sm:$0xff]
                  %2406 = vst [vmem:[%s2348 + $0x160] sm:$0xff] %v2405
                  %v2407 = vld [vmem:[%s2347 + $0xe8] sm:$0xff]
                  %2408 = vst [vmem:[%s2348 + $0x168] sm:$0xff] %v2407
                  %v2409 = vld [vmem:[%s2347 + $0xf0] sm:$0xff]
                  %2410 = vst [vmem:[%s2348 + $0x170] sm:$0xff] %v2409
                  %v2411 = vld [vmem:[%s2347 + $0xf8] sm:$0xff]
                  %2412 = vst [vmem:[%s2348 + $0x178] sm:$0xff] %v2411
                $region102: #{tpu_custom_call.1} parent=96 // loop_footer
                  %s2346 = sadd.s32 1, %s2342
                $region103: #{tpu_custom_call.1} parent=96 // loop_footer_branch
                  %2341 = sbr.rel target = $region99
                $region104: #{tpu_custom_call.1} parent=96 // loop_exit
                  _
              $region97: #{tpu_custom_call.1} parent=81 // pred_fallthru
                _
              // Predicated region
              $region105: #{tpu_custom_call.1} parent=81 // pred_check
                _
              $region106: #{tpu_custom_call.1} parent=81 // pred_check_branch
                %2414 = sbr.rel target = $region108
              $region107: #{tpu_custom_call.1} parent=81 // pred_region
                _
              $region108: #{tpu_custom_call.1} parent=81 // pred_fallthru
                _
            $region82: #{tpu_custom_call.1} parent=77 // pred_fallthru
              _
            // Predicated region
            $region83: #{tpu_custom_call.1} parent=77 // pred_check
              _
            $region84: #{tpu_custom_call.1} parent=77 // pred_check_branch
              %2265 = sbr.rel target = $region86
            $region85: #{tpu_custom_call.1} parent=77 // pred_region
              loop: start=0, step=1, limit=1
              $region87: #{tpu_custom_call.1} parent=85 // loop_pre_header
                _
              $region88: #{tpu_custom_call.1} parent=85 // loop_header
                %s2268 = sphi 0, %s2272
                %p2269 = scmp.ge.s32.totalorder %s2268, 1
                %s2273 = sphi %s2248, %s2248
                %s2274 = sphi %s2259, %s2259
              $region89: #{tpu_custom_call.1} parent=85 // loop_header_branch
                %2271 = sbr.rel (%p2269) target = $region93
              $region90: #{tpu_custom_call.1} parent=85 // loop_body
                %v2275 = vld [vmem:[%s2273] sm:$0xff]
                %2276 = vst [vmem:[%s2274] sm:$0xff] %v2275
                %v2277 = vld [vmem:[%s2273 + $0x8] sm:$0xff]
                %2278 = vst [vmem:[%s2274 + $0x8] sm:$0xff] %v2277
                %v2279 = vld [vmem:[%s2273 + $0x10] sm:$0xff]
                %2280 = vst [vmem:[%s2274 + $0x10] sm:$0xff] %v2279
                %v2281 = vld [vmem:[%s2273 + $0x18] sm:$0xff]
                %2282 = vst [vmem:[%s2274 + $0x18] sm:$0xff] %v2281
                %v2283 = vld [vmem:[%s2273 + $0x20] sm:$0xff]
                %2284 = vst [vmem:[%s2274 + $0x20] sm:$0xff] %v2283
                %v2285 = vld [vmem:[%s2273 + $0x28] sm:$0xff]
                %2286 = vst [vmem:[%s2274 + $0x28] sm:$0xff] %v2285
                %v2287 = vld [vmem:[%s2273 + $0x30] sm:$0xff]
                %2288 = vst [vmem:[%s2274 + $0x30] sm:$0xff] %v2287
                %v2289 = vld [vmem:[%s2273 + $0x38] sm:$0xff]
                %2290 = vst [vmem:[%s2274 + $0x38] sm:$0xff] %v2289
                %v2291 = vld [vmem:[%s2273 + $0x40] sm:$0xff]
                %2292 = vst [vmem:[%s2274 + $0x40] sm:$0xff] %v2291
                %v2293 = vld [vmem:[%s2273 + $0x48] sm:$0xff]
                %2294 = vst [vmem:[%s2274 + $0x48] sm:$0xff] %v2293
                %v2295 = vld [vmem:[%s2273 + $0x50] sm:$0xff]
                %2296 = vst [vmem:[%s2274 + $0x50] sm:$0xff] %v2295
                %v2297 = vld [vmem:[%s2273 + $0x58] sm:$0xff]
                %2298 = vst [vmem:[%s2274 + $0x58] sm:$0xff] %v2297
                %v2299 = vld [vmem:[%s2273 + $0x60] sm:$0xff]
                %2300 = vst [vmem:[%s2274 + $0x60] sm:$0xff] %v2299
                %v2301 = vld [vmem:[%s2273 + $0x68] sm:$0xff]
                %2302 = vst [vmem:[%s2274 + $0x68] sm:$0xff] %v2301
                %v2303 = vld [vmem:[%s2273 + $0x70] sm:$0xff]
                %2304 = vst [vmem:[%s2274 + $0x70] sm:$0xff] %v2303
                %v2305 = vld [vmem:[%s2273 + $0x78] sm:$0xff]
                %2306 = vst [vmem:[%s2274 + $0x78] sm:$0xff] %v2305
                %v2307 = vld [vmem:[%s2273 + $0x80] sm:$0xff]
                %2308 = vst [vmem:[%s2274 + $0x100] sm:$0xff] %v2307
                %v2309 = vld [vmem:[%s2273 + $0x88] sm:$0xff]
                %2310 = vst [vmem:[%s2274 + $0x108] sm:$0xff] %v2309
                %v2311 = vld [vmem:[%s2273 + $0x90] sm:$0xff]
                %2312 = vst [vmem:[%s2274 + $0x110] sm:$0xff] %v2311
                %v2313 = vld [vmem:[%s2273 + $0x98] sm:$0xff]
                %2314 = vst [vmem:[%s2274 + $0x118] sm:$0xff] %v2313
                %v2315 = vld [vmem:[%s2273 + $0xa0] sm:$0xff]
                %2316 = vst [vmem:[%s2274 + $0x120] sm:$0xff] %v2315
                %v2317 = vld [vmem:[%s2273 + $0xa8] sm:$0xff]
                %2318 = vst [vmem:[%s2274 + $0x128] sm:$0xff] %v2317
                %v2319 = vld [vmem:[%s2273 + $0xb0] sm:$0xff]
                %2320 = vst [vmem:[%s2274 + $0x130] sm:$0xff] %v2319
                %v2321 = vld [vmem:[%s2273 + $0xb8] sm:$0xff]
                %2322 = vst [vmem:[%s2274 + $0x138] sm:$0xff] %v2321
                %v2323 = vld [vmem:[%s2273 + $0xc0] sm:$0xff]
                %2324 = vst [vmem:[%s2274 + $0x140] sm:$0xff] %v2323
                %v2325 = vld [vmem:[%s2273 + $0xc8] sm:$0xff]
                %2326 = vst [vmem:[%s2274 + $0x148] sm:$0xff] %v2325
                %v2327 = vld [vmem:[%s2273 + $0xd0] sm:$0xff]
                %2328 = vst [vmem:[%s2274 + $0x150] sm:$0xff] %v2327
                %v2329 = vld [vmem:[%s2273 + $0xd8] sm:$0xff]
                %2330 = vst [vmem:[%s2274 + $0x158] sm:$0xff] %v2329
                %v2331 = vld [vmem:[%s2273 + $0xe0] sm:$0xff]
                %2332 = vst [vmem:[%s2274 + $0x160] sm:$0xff] %v2331
                %v2333 = vld [vmem:[%s2273 + $0xe8] sm:$0xff]
                %2334 = vst [vmem:[%s2274 + $0x168] sm:$0xff] %v2333
                %v2335 = vld [vmem:[%s2273 + $0xf0] sm:$0xff]
                %2336 = vst [vmem:[%s2274 + $0x170] sm:$0xff] %v2335
                %v2337 = vld [vmem:[%s2273 + $0xf8] sm:$0xff]
                %2338 = vst [vmem:[%s2274 + $0x178] sm:$0xff] %v2337
              $region91: #{tpu_custom_call.1} parent=85 // loop_footer
                %s2272 = sadd.s32 1, %s2268
              $region92: #{tpu_custom_call.1} parent=85 // loop_footer_branch
                %2267 = sbr.rel target = $region88
              $region93: #{tpu_custom_call.1} parent=85 // loop_exit
                _
            $region86: #{tpu_custom_call.1} parent=77 // pred_fallthru
              _
          $region78: #{tpu_custom_call.1} parent=73 // pred_fallthru
            _
          %2415 = vnop
        $region74: #{tpu_custom_call.1} parent=65 // pred_fallthru
          _
        // Predicated region
        $region109: #{tpu_custom_call.1} parent=65 // pred_check
          %p2416 = pneg %p131
        $region110: #{tpu_custom_call.1} parent=65 // pred_check_branch
          %2418 = sbr.rel (%p2416) target = $region112
        $region111: #{tpu_custom_call.1} parent=65 // pred_region
          %s2420 = ssub.s32 32, 32
          %2421 = vsyncadd %s2250, %s2420
          %s2422 = smul.addr %s19, 32
          %s2423 = scalar_lea.hbm %s4, %s2422
          %s2425 = sshll.u32 %s2253, 4
          %s2426 = int_to_ptr.vmem [resolvable:$true] %s2425
          %2428 = dma.vmem_to_hbm [thread:$0]  %s2426, 32, %s2423, %s2250
        $region112: #{tpu_custom_call.1} parent=65 // pred_fallthru
          _
      $region66: #{tpu_custom_call.1} parent=5 // pred_fallthru
        _
      %p2429 = scmp.le.s32.totalorder 2, %s14
      // Predicated region
      $region113: #{tpu_custom_call.1} parent=5 // pred_check
        %p2430 = pneg %p2429
      $region114: #{tpu_custom_call.1} parent=5 // pred_check_branch
        %2432 = sbr.rel (%p2430) target = $region116
      $region115: #{tpu_custom_call.1} parent=5 // pred_region
        %s2433 = ssub.s32 %s14, 2
        // Predicated region
        $region117: #{tpu_custom_call.1} parent=115 // pred_check
          %p2434 = pneg %p111
        $region118: #{tpu_custom_call.1} parent=115 // pred_check_branch
          %2436 = sbr.rel (%p2434) target = $region120
        $region119: #{tpu_custom_call.1} parent=115 // pred_region
          %s2437 = sand.u32 %s96, 1
          %s2438 = sand.u32 %s96, 1
          %s2439 = smul.addr %s2438, 256
          %s2440 = scalar_lea.vmem [#allocation3], %s2439
        $region120: #{tpu_custom_call.1} parent=115 // pred_fallthru
          _
        // Predicated region
        $region121: #{tpu_custom_call.1} parent=115 // pred_check
          %p2441 = pneg %p137
        $region122: #{tpu_custom_call.1} parent=115 // pred_check_branch
          %2443 = sbr.rel (%p2441) target = $region124
        $region123: #{tpu_custom_call.1} parent=115 // pred_region
          %s2444 = sand.u32 %s122, 1
          %s2445 = scalar_lea.sflag [#allocation5], %s2444
          %s2446 = sand.u32 %s122, 1
          %s2447 = smul.addr %s2446, 2
          %s2448 = scalar_lea.vmem [#allocation4], %s2447
          %2449 = dma.done %s2445, 32
        $region124: #{tpu_custom_call.1} parent=115 // pred_fallthru
          _
      $region116: #{tpu_custom_call.1} parent=5 // pred_fallthru
        _
    $region6: #{tpu_custom_call.1} parent=1 // loop_footer
      %s18 = sadd.s32 1, %s14
    $region7: #{tpu_custom_call.1} parent=1 // loop_footer_branch
      %13 = sbr.rel target = $region3
    $region8: #{tpu_custom_call.1} parent=1 // loop_exit
      _
    %2450 = vsyncpa [#allocation5], 1
    %s2451 = scalar_lea.sflag [#allocation5], 1
    %2452 = vsyncpa %s2451, 1

</llo_original>
